<compile_context>
chip_gen: v5e
topology: v5e:2x2
jax: 0.10.0
libtpu: 0.0.40
codegen_flags: <defaults>
</compile_context>

<pallas_src>
import jax
import jax.numpy as jnp
from jax.experimental import pallas as pl
from jax.experimental.pallas import tpu as pltpu

NEG_SLOPE = 0.01  # nn.LeakyReLU() default


def _leaky_relu(z):
    return jnp.where(z >= 0, z, NEG_SLOPE * z)


def _round_up(a, b):
    return ((a + b - 1) // b) * b


def _padded_bytes(shape):
    r, c = shape
    return _round_up(r, 8) * _round_up(c, 128) * 4


def _fc_decode_kernel(x_ref, w0, w1, w2, w3, w4, w5, w6_ref, o_ref, h_ref):
    # Grid = (row_tiles, col_tiles_of_final_layer).  The 6-layer prefix only
    # depends on the row tile, so compute it once per row tile (j == 0) and
    # keep it resident in VMEM scratch across the output-column tiles.
    @pl.when(pl.program_id(1) == 0)
    def _():
        h = x_ref[...].astype(jnp.float32)
        h = _leaky_relu(jnp.dot(h, w0[...], preferred_element_type=jnp.float32))
        h = _leaky_relu(jnp.dot(h, w1[...], preferred_element_type=jnp.float32))
        h = _leaky_relu(jnp.dot(h, w2[...], preferred_element_type=jnp.float32))
        h = _leaky_relu(jnp.dot(h, w3[...], preferred_element_type=jnp.float32))
        h = _leaky_relu(jnp.dot(h, w4[...], preferred_element_type=jnp.float32))
        h = _leaky_relu(jnp.dot(h, w5[...], preferred_element_type=jnp.float32))
        h_ref[...] = h

    # Final Linear (no activation), one output-column tile at a time.
    o_ref[...] = jnp.dot(
        h_ref[...], w6_ref[...], preferred_element_type=jnp.float32
    ).astype(o_ref.dtype)


def _vmem_estimate(weights, in_dim, n4, tile_m, tile_n):
    return (
        sum(_padded_bytes(w.shape) for w in weights[:-1])  # resident, 1x
        + 2 * _padded_bytes((n4, tile_n))                  # w6 tile, double-buffered
        + 2 * _padded_bytes((tile_m, in_dim))              # x tile
        + 2 * _padded_bytes((tile_m, tile_n))              # out tile
        + _padded_bytes((tile_m, n4))                      # prefix scratch
    )


def fc_decode_pallas(x, weights, *, tile_m=None, tile_n=None, vmem_limit_bytes=None):
    """x: (N, 3) float32.  weights: list of 7 (in, out) float32 matrices."""
    N, in_dim = x.shape
    n4, n_feats = weights[-1].shape

    # Row tile: large enough to amortize per-step overhead and fill the MXU,
    # but keep >= 2 row tiles for v7x megacore; shrink when the prefix width
    # (n/4) is very large so the h scratch stays modest.
    if tile_m is None:
        if N >= 2048:
            tile_m = 512 if n4 >= 4096 else 1024
        elif N >= 1024:
            tile_m = 512
        elif N >= 512:
            tile_m = 256
        else:
            tile_m = _round_up(N, 8)

    # Column tile for the final layer: caps VMEM independent of n_feats (the
    # final weight scales as n^2).  Pick the largest divisor of n_feats that
    # keeps the VMEM estimate under budget (~48 MiB -> fits v7x's 64 MiB).
    if tile_n is None:
        tile_n = n_feats
        budget = 48 << 20
        if _vmem_estimate(weights, in_dim, n4, tile_m, n_feats) > budget:
            for cand in (2048, 1024, 512, 256, 128):
                if n_feats % cand == 0 and (
                    _vmem_estimate(weights, in_dim, n4, tile_m, cand) <= budget
                    or cand == 128
                ):
                    tile_n = cand
                    break
    assert n_feats % tile_n == 0, "tile_n must divide n_feats"

    # Pad ragged batches; padded rows are sliced off after the call.
    n_pad = _round_up(N, tile_m)
    if n_pad != N:
        x = jnp.pad(x, ((0, n_pad - N), (0, 0)))

    grid = (n_pad // tile_m, n_feats // tile_n)

    if vmem_limit_bytes is None:
        est = _vmem_estimate(weights, in_dim, n4, tile_m, tile_n)
        vmem_limit_bytes = min(max(int(est * 1.5), 32 << 20), 64 << 20)

    # Layers 0-5: tiny weights, constant across the grid -> untiled,
    # VMEM-resident, single-buffered (no per-step DMA).
    w_resident_specs = [
        pl.BlockSpec(memory_space=pltpu.MemorySpace.VMEM) for _ in range(6)
    ]
    in_specs = (
        [pl.BlockSpec((tile_m, in_dim), lambda i, j: (i, 0))]
        + w_resident_specs
        + [pl.BlockSpec((n4, tile_n), lambda i, j: (0, j))]
    )

    flops = 2 * n_pad * sum(int(w.shape[0]) * int(w.shape[1]) for w in weights)
    bytes_accessed = 4 * (
        n_pad * in_dim + sum(int(w.size) for w in weights) + n_pad * n_feats
    )

    out = pl.pallas_call(
        _fc_decode_kernel,
        out_shape=jax.ShapeDtypeStruct((n_pad, n_feats), jnp.float32),
        grid_spec=pltpu.PrefetchScalarGridSpec(
            num_scalar_prefetch=0,
            grid=grid,
            in_specs=in_specs,
            out_specs=pl.BlockSpec((tile_m, tile_n), lambda i, j: (i, j)),
            scratch_shapes=[pltpu.VMEM((tile_m, n4), jnp.float32)],
        ),
        compiler_params=pltpu.CompilerParams(
            dimension_semantics=("parallel", "arbitrary"),
            vmem_limit_bytes=vmem_limit_bytes,
        ),
        cost_estimate=pl.CostEstimate(
            flops=flops, transcendentals=0, bytes_accessed=bytes_accessed
        ),
    )(x, *weights)

    return out[:N] if n_pad != N else out


def xavier_uniform(key, fan_in, fan_out):
    # Matches torch.nn.init.xavier_uniform_ (gain=1): U(-a, a), a = sqrt(6/(fi+fo)).
    bound = jnp.sqrt(6.0 / (fan_in + fan_out))
    return jax.random.uniform(
        key, (fan_in, fan_out), dtype=jnp.float32, minval=-bound, maxval=bound
    )


def make_weights(key, n_feats):
    dims = [
        3,
        n_feats // 64,
        n_feats // 64,
        n_feats // 32,
        n_feats // 16,
        n_feats // 8,
        n_feats // 4,
        n_feats,
    ]
    keys = jax.random.split(key, len(dims) - 1)
    return [xavier_uniform(k, dims[i], dims[i + 1]) for i, k in enumerate(keys)]


def fc_decode_ref(x, weights):
    h = x
    for w in weights[:-1]:
        h = _leaky_relu(h @ w)
    return h @ weights[-1]


if __name__ == "__main__":
    key = jax.random.PRNGKey(0)
    k_x, k_w = jax.random.split(key)

    n_feats = 256  # smallest n_feats keeping all hidden dims >= 4
    N = 600        # ragged batch -> exercises the padding path

    x = jax.random.normal(k_x, (N, 3), dtype=jnp.float32)
    weights = make_weights(k_w, n_feats)

    # tile_n=128 exercises the column-tiled final layer + pl.when prefix path
    # even at this small n_feats (auto-selection would pick tile_n = n_feats).
    out = fc_decode_pallas(x, weights, tile_n=128)
    out = jax.block_until_ready(out)

    ref = fc_decode_ref(x, weights)
    assert out.shape == (N, n_feats)
    assert jnp.allclose(out, ref, atol=5e-4, rtol=5e-4)

    print("KERNEL_OK")
</pallas_src>

<mosaic_0001>
module attributes {stable_mosaic.version = 11 : i64} {
  func.func @_fc_decode_kernel(%arg0: i32, %arg1: i32, %arg2: memref<256x3xf32, #tpu.memory_space<vmem>>, %arg3: memref<3x4xf32, #tpu.memory_space<vmem>>, %arg4: memref<4x4xf32, #tpu.memory_space<vmem>>, %arg5: memref<4x8xf32, #tpu.memory_space<vmem>>, %arg6: memref<8x16xf32, #tpu.memory_space<vmem>>, %arg7: memref<16x32xf32, #tpu.memory_space<vmem>>, %arg8: memref<32x64xf32, #tpu.memory_space<vmem>>, %arg9: memref<64x128xf32, #tpu.memory_space<vmem>>, %arg10: memref<256x128xf32, #tpu.memory_space<vmem>>, %arg11: memref<256x64xf32, #tpu.memory_space<vmem>>) attributes {dimension_semantics = [#tpu.dimension_semantics<parallel>, #tpu.dimension_semantics<arbitrary>], iteration_bounds = array<i64: 3, 2>, scalar_prefetch = 0 : i64, scratch_operands = 1 : i64, tpu.core_type = #tpu.core_type<tc>, window_params = [{transform_indices = @transform_0, window_bounds = array<i64: 256, 3>}, {pipeline_mode = #tpu.pipeline_mode<synchronous>, transform_indices = @transform_1, window_bounds = array<i64: 3, 4>}, {pipeline_mode = #tpu.pipeline_mode<synchronous>, transform_indices = @transform_2, window_bounds = array<i64: 4, 4>}, {pipeline_mode = #tpu.pipeline_mode<synchronous>, transform_indices = @transform_3, window_bounds = array<i64: 4, 8>}, {pipeline_mode = #tpu.pipeline_mode<synchronous>, transform_indices = @transform_4, window_bounds = array<i64: 8, 16>}, {pipeline_mode = #tpu.pipeline_mode<synchronous>, transform_indices = @transform_5, window_bounds = array<i64: 16, 32>}, {pipeline_mode = #tpu.pipeline_mode<synchronous>, transform_indices = @transform_6, window_bounds = array<i64: 32, 64>}, {transform_indices = @transform_7, window_bounds = array<i64: 64, 128>}, {transform_indices = @transform_8, window_bounds = array<i64: 256, 128>}]} {
    %c0_i32 = arith.constant 0 : i32
    %0 = arith.cmpi eq, %arg1, %c0_i32 : i32
    %1 = arith.extui %0 : i1 to i32
    %c0_i32_0 = arith.constant 0 : i32
    %2 = arith.cmpi ne, %1, %c0_i32_0 : i32
    scf.if %2 {
      %c0_6 = arith.constant 0 : index
      %c0_7 = arith.constant 0 : index
      %7 = vector.load %arg2[%c0_6, %c0_7] : memref<256x3xf32, #tpu.memory_space<vmem>>, vector<256x3xf32>
      %c0_8 = arith.constant 0 : index
      %c0_9 = arith.constant 0 : index
      %8 = vector.load %arg3[%c0_8, %c0_9] : memref<3x4xf32, #tpu.memory_space<vmem>>, vector<3x4xf32>
      %cst_10 = arith.constant dense<0.000000e+00> : vector<256x4xf32>
      %9 = tpu.matmul %7, %8, %cst_10 {dimension_numbers = #tpu.dot_dimension_numbers<[1], [0], [0], [1], [0, 0, 1, 1], [], []>} : vector<256x3xf32>, vector<3x4xf32>, vector<256x4xf32> -> vector<256x4xf32>
      %cst_11 = arith.constant 0.000000e+00 : f32
      %10 = vector.broadcast %cst_11 : f32 to vector<256x4xf32>
      %11 = arith.cmpf oge, %9, %10 : vector<256x4xf32>
      %cst_12 = arith.constant 0.00999999977 : f32
      %12 = vector.broadcast %cst_12 : f32 to vector<256x4xf32>
      %13 = arith.mulf %12, %9 : vector<256x4xf32>
      %14 = arith.select %11, %9, %13 : vector<256x4xi1>, vector<256x4xf32>
      %c0_13 = arith.constant 0 : index
      %c0_14 = arith.constant 0 : index
      %15 = vector.load %arg4[%c0_13, %c0_14] : memref<4x4xf32, #tpu.memory_space<vmem>>, vector<4x4xf32>
      %cst_15 = arith.constant dense<0.000000e+00> : vector<256x4xf32>
      %16 = tpu.matmul %14, %15, %cst_15 {dimension_numbers = #tpu.dot_dimension_numbers<[1], [0], [0], [1], [0, 0, 1, 1], [], []>} : vector<256x4xf32>, vector<4x4xf32>, vector<256x4xf32> -> vector<256x4xf32>
      %cst_16 = arith.constant 0.000000e+00 : f32
      %17 = vector.broadcast %cst_16 : f32 to vector<256x4xf32>
      %18 = arith.cmpf oge, %16, %17 : vector<256x4xf32>
      %cst_17 = arith.constant 0.00999999977 : f32
      %19 = vector.broadcast %cst_17 : f32 to vector<256x4xf32>
      %20 = arith.mulf %19, %16 : vector<256x4xf32>
      %21 = arith.select %18, %16, %20 : vector<256x4xi1>, vector<256x4xf32>
      %c0_18 = arith.constant 0 : index
      %c0_19 = arith.constant 0 : index
      %22 = vector.load %arg5[%c0_18, %c0_19] : memref<4x8xf32, #tpu.memory_space<vmem>>, vector<4x8xf32>
      %cst_20 = arith.constant dense<0.000000e+00> : vector<256x8xf32>
      %23 = tpu.matmul %21, %22, %cst_20 {dimension_numbers = #tpu.dot_dimension_numbers<[1], [0], [0], [1], [0, 0, 1, 1], [], []>} : vector<256x4xf32>, vector<4x8xf32>, vector<256x8xf32> -> vector<256x8xf32>
      %cst_21 = arith.constant 0.000000e+00 : f32
      %24 = vector.broadcast %cst_21 : f32 to vector<256x8xf32>
      %25 = arith.cmpf oge, %23, %24 : vector<256x8xf32>
      %cst_22 = arith.constant 0.00999999977 : f32
      %26 = vector.broadcast %cst_22 : f32 to vector<256x8xf32>
      %27 = arith.mulf %26, %23 : vector<256x8xf32>
      %28 = arith.select %25, %23, %27 : vector<256x8xi1>, vector<256x8xf32>
      %c0_23 = arith.constant 0 : index
      %c0_24 = arith.constant 0 : index
      %29 = vector.load %arg6[%c0_23, %c0_24] : memref<8x16xf32, #tpu.memory_space<vmem>>, vector<8x16xf32>
      %cst_25 = arith.constant dense<0.000000e+00> : vector<256x16xf32>
      %30 = tpu.matmul %28, %29, %cst_25 {dimension_numbers = #tpu.dot_dimension_numbers<[1], [0], [0], [1], [0, 0, 1, 1], [], []>} : vector<256x8xf32>, vector<8x16xf32>, vector<256x16xf32> -> vector<256x16xf32>
      %cst_26 = arith.constant 0.000000e+00 : f32
      %31 = vector.broadcast %cst_26 : f32 to vector<256x16xf32>
      %32 = arith.cmpf oge, %30, %31 : vector<256x16xf32>
      %cst_27 = arith.constant 0.00999999977 : f32
      %33 = vector.broadcast %cst_27 : f32 to vector<256x16xf32>
      %34 = arith.mulf %33, %30 : vector<256x16xf32>
      %35 = arith.select %32, %30, %34 : vector<256x16xi1>, vector<256x16xf32>
      %c0_28 = arith.constant 0 : index
      %c0_29 = arith.constant 0 : index
      %36 = vector.load %arg7[%c0_28, %c0_29] : memref<16x32xf32, #tpu.memory_space<vmem>>, vector<16x32xf32>
      %cst_30 = arith.constant dense<0.000000e+00> : vector<256x32xf32>
      %37 = tpu.matmul %35, %36, %cst_30 {dimension_numbers = #tpu.dot_dimension_numbers<[1], [0], [0], [1], [0, 0, 1, 1], [], []>} : vector<256x16xf32>, vector<16x32xf32>, vector<256x32xf32> -> vector<256x32xf32>
      %cst_31 = arith.constant 0.000000e+00 : f32
      %38 = vector.broadcast %cst_31 : f32 to vector<256x32xf32>
      %39 = arith.cmpf oge, %37, %38 : vector<256x32xf32>
      %cst_32 = arith.constant 0.00999999977 : f32
      %40 = vector.broadcast %cst_32 : f32 to vector<256x32xf32>
      %41 = arith.mulf %40, %37 : vector<256x32xf32>
      %42 = arith.select %39, %37, %41 : vector<256x32xi1>, vector<256x32xf32>
      %c0_33 = arith.constant 0 : index
      %c0_34 = arith.constant 0 : index
      %43 = vector.load %arg8[%c0_33, %c0_34] : memref<32x64xf32, #tpu.memory_space<vmem>>, vector<32x64xf32>
      %cst_35 = arith.constant dense<0.000000e+00> : vector<256x64xf32>
      %44 = tpu.matmul %42, %43, %cst_35 {dimension_numbers = #tpu.dot_dimension_numbers<[1], [0], [0], [1], [0, 0, 1, 1], [], []>} : vector<256x32xf32>, vector<32x64xf32>, vector<256x64xf32> -> vector<256x64xf32>
      %cst_36 = arith.constant 0.000000e+00 : f32
      %45 = vector.broadcast %cst_36 : f32 to vector<256x64xf32>
      %46 = arith.cmpf oge, %44, %45 : vector<256x64xf32>
      %cst_37 = arith.constant 0.00999999977 : f32
      %47 = vector.broadcast %cst_37 : f32 to vector<256x64xf32>
      %48 = arith.mulf %47, %44 : vector<256x64xf32>
      %49 = arith.select %46, %44, %48 : vector<256x64xi1>, vector<256x64xf32>
      %c0_38 = arith.constant 0 : index
      %c0_39 = arith.constant 0 : index
      %50 = vector.load %arg11[%c0_38, %c0_39] : memref<256x64xf32, #tpu.memory_space<vmem>>, vector<256x64xf32>
      tpu.vector_store %arg11[%c0_38, %c0_39], %49 {strides = array<i32>} : memref<256x64xf32, #tpu.memory_space<vmem>>, vector<256x64xf32>,
    } else {
    }
    %c0 = arith.constant 0 : index
    %c0_1 = arith.constant 0 : index
    %3 = vector.load %arg11[%c0, %c0_1] : memref<256x64xf32, #tpu.memory_space<vmem>>, vector<256x64xf32>
    %c0_2 = arith.constant 0 : index
    %c0_3 = arith.constant 0 : index
    %4 = vector.load %arg9[%c0_2, %c0_3] : memref<64x128xf32, #tpu.memory_space<vmem>>, vector<64x128xf32>
    %cst = arith.constant dense<0.000000e+00> : vector<256x128xf32>
    %5 = tpu.matmul %3, %4, %cst {dimension_numbers = #tpu.dot_dimension_numbers<[1], [0], [0], [1], [0, 0, 1, 1], [], []>} : vector<256x64xf32>, vector<64x128xf32>, vector<256x128xf32> -> vector<256x128xf32>
    %c0_4 = arith.constant 0 : index
    %c0_5 = arith.constant 0 : index
    %6 = vector.load %arg10[%c0_4, %c0_5] : memref<256x128xf32, #tpu.memory_space<vmem>>, vector<256x128xf32>
    tpu.vector_store %arg10[%c0_4, %c0_5], %5 {strides = array<i32>} : memref<256x128xf32, #tpu.memory_space<vmem>>, vector<256x128xf32>,
    return
  }
  func.func @transform_0(%arg0: i32, %arg1: i32) -> (i32, i32) {
    %c0_i32 = arith.constant 0 : i32
    %c0_i32_0 = arith.constant 0 : i32
    return %arg0, %c0_i32 : i32, i32
  }
  func.func @transform_1(%arg0: i32, %arg1: i32) -> (i32, i32) {
    %c0_i32 = arith.constant 0 : i32
    %c0_i32_0 = arith.constant 0 : i32
    %c0_i32_1 = arith.constant 0 : i32
    return %c0_i32, %c0_i32_0 : i32, i32
  }
  func.func @transform_2(%arg0: i32, %arg1: i32) -> (i32, i32) {
    %c0_i32 = arith.constant 0 : i32
    %c0_i32_0 = arith.constant 0 : i32
    %c0_i32_1 = arith.constant 0 : i32
    return %c0_i32, %c0_i32_0 : i32, i32
  }
  func.func @transform_3(%arg0: i32, %arg1: i32) -> (i32, i32) {
    %c0_i32 = arith.constant 0 : i32
    %c0_i32_0 = arith.constant 0 : i32
    %c0_i32_1 = arith.constant 0 : i32
    return %c0_i32, %c0_i32_0 : i32, i32
  }
  func.func @transform_4(%arg0: i32, %arg1: i32) -> (i32, i32) {
    %c0_i32 = arith.constant 0 : i32
    %c0_i32_0 = arith.constant 0 : i32
    %c0_i32_1 = arith.constant 0 : i32
    return %c0_i32, %c0_i32_0 : i32, i32
  }
  func.func @transform_5(%arg0: i32, %arg1: i32) -> (i32, i32) {
    %c0_i32 = arith.constant 0 : i32
    %c0_i32_0 = arith.constant 0 : i32
    %c0_i32_1 = arith.constant 0 : i32
    return %c0_i32, %c0_i32_0 : i32, i32
  }
  func.func @transform_6(%arg0: i32, %arg1: i32) -> (i32, i32) {
    %c0_i32 = arith.constant 0 : i32
    %c0_i32_0 = arith.constant 0 : i32
    %c0_i32_1 = arith.constant 0 : i32
    return %c0_i32, %c0_i32_0 : i32, i32
  }
  func.func @transform_7(%arg0: i32, %arg1: i32) -> (i32, i32) {
    %c0_i32 = arith.constant 0 : i32
    %c0_i32_0 = arith.constant 0 : i32
    return %c0_i32, %arg1 : i32, i32
  }
  func.func @transform_8(%arg0: i32, %arg1: i32) -> (i32, i32) {
    %c0_i32 = arith.constant 0 : i32
    return %arg0, %arg1 : i32, i32
  }
}

</mosaic_0001>

<llo_original>
// kernel: tpu_custom_call.1
$region0: #{tpu_custom_call.1}
  #allocation0 [shape = 'u32[]', space=smem, size = 0x4, offset = 0x4, fixed_abs, tag = 'smem constant byte address 0x4 - core index']
  #allocation1 [shape = 'u32[72,128]{1,0:T(1,128)}', space=vmem, size = 0x9000, scoped, tag = 'internal scratch']
  #allocation2 [shape = 'f32[256,64]{1,0:T(8,128)}', space=vmem, size = 0x20000, scoped, tag = 'scratch operand']
  %s0 = inlined_call_operand.vmem [shape: f32[768,3], index: 0, kind: input, shape index: {}]
  %s1 = inlined_call_operand.vmem [shape: f32[3,4], index: 1, kind: input, shape index: {}]
  %s2 = inlined_call_operand.vmem [shape: f32[4,4], index: 2, kind: input, shape index: {}]
  %s3 = inlined_call_operand.vmem [shape: f32[4,8], index: 3, kind: input, shape index: {}]
  %s4 = inlined_call_operand.vmem [shape: f32[8,16], index: 4, kind: input, shape index: {}]
  %s5 = inlined_call_operand.vmem [shape: f32[16,32], index: 5, kind: input, shape index: {}]
  %s6 = inlined_call_operand.vmem [shape: f32[32,64], index: 6, kind: input, shape index: {}]
  %s7 = inlined_call_operand.vmem [shape: f32[64,256], index: 7, kind: input, shape index: {}]
  %s8 = inlined_call_operand.hbm [shape: f32[768,256], index: 8, kind: output, shape index: {}]
  %s9 = sld [smem:[#allocation0]]
  $region107: #{tpu_custom_call.1} parent=0
    _
  %s11 = ssub.s32 1, %s9
  %s12 = scalar_select 0, %s11, %s9
  $region1: #{tpu_custom_call.1} parent=0
    #allocation3 [shape = 'u8[65536]{0}', space=vmem, size = 0x10000, scoped, tag = 'input window, operand 7']
    #allocation4 [shape = 'u8[262144]{0}', space=vmem, size = 0x40000, scoped, tag = 'output window, operand 0']
    #allocation5 [shape = 's32[2]{0}', space=sflag, size = 0x8, scoped, tag = 'scoped memory for tpu_custom_call.1']
    %13 = vsyncpa [#allocation5], 0
    %s14 = scalar_lea.sflag [#allocation5], 1
    %15 = vsyncpa %s14, 0
    loop: start=0, step=1, limit=8
    $region2: #{tpu_custom_call.1} parent=1 // loop_pre_header
      _
    $region3: #{tpu_custom_call.1} parent=1 // loop_header
      %s17 = sphi 0, %s21
      %p18 = scmp.ge.s32.totalorder %s17, 8
      %s24 = sphi 0, %s36
      %s25 = sphi 0, %s32
      %s26 = sphi 0, %s24
      %s27 = sphi 0, %s25
      %s28 = sphi 0, %s26
      %s29 = sphi 0, %s27
      %s39 = sphi 0, %s41
      %s42 = sphi 0, %s39
      %s43 = sphi 0, %s42
      %s59 = sphi 0, %s43
      %s63 = sphi 0, %s63
      %s65 = sphi 0, %s63
      %s66 = sphi 0, %s65
      %s80 = sphi 0, %s66
      %s84 = sphi 0, %s84
      %s86 = sphi 0, %s84
      %s87 = sphi 0, %s86
      %s101 = sphi 0, %s87
      %s105 = sphi 0, %s105
      %s107 = sphi 0, %s105
      %s108 = sphi 0, %s107
      %s122 = sphi 0, %s108
      %s126 = sphi 0, %s126
      %s128 = sphi 0, %s126
      %s129 = sphi 0, %s128
      %s143 = sphi 0, %s129
      %s147 = sphi 0, %s147
      %s149 = sphi 0, %s147
      %s150 = sphi 0, %s149
      %s164 = sphi 0, %s150
      %s168 = sphi 0, %s168
      %s170 = sphi 0, %s168
      %s171 = sphi 0, %s170
      %s185 = sphi 0, %s171
      %s191 = sphi 0, %s193
      %s194 = sphi 0, %s191
      %s195 = sphi 0, %s194
      %s211 = sphi 0, %s195
      %s219 = sphi 0, %s221
      %s222 = sphi 0, %s219
      %s223 = sphi 0, %s222
      %s239 = sphi 0, %s223
    $region4: #{tpu_custom_call.1} parent=1 // loop_header_branch
      %20 = sbr.rel (%p18) target = $region8
    $region5: #{tpu_custom_call.1} parent=1 // loop_body
      %s22 = ssub.s32 %s17, 1
      %s23 = ssub.s32 %s17, 2
      %s30 = sadd.s32 1, %s25
      %p31 = scmp.ge.s32.totalorder %s30, 2
      %s32 = scalar_select %p31, 0, %s30
      %s33 = sadd.s32 1, %s24
      %s34 = scalar_select %p31, %s33, %s24
      %p35 = scmp.ge.s32.totalorder %s34, 3
      %s36 = scalar_select %p35, 0, %s34
      %s37 = ssub.s32 %s24, %s36
      %p38 = scmp.eq.s32.totalorder %s37, 0
      %s40 = sadd.s32 %s39, 1
      %s41 = scalar_select %p38, %s39, %s40
      %p44 = pneg %p38
      %p45 = scmp.eq.s32.totalorder %s17, 5
      %p46 = por %p44, %p45
      %p47 = scmp.ne.s32.totalorder %s39, %s42
      %p48 = scmp.eq.s32.totalorder %s17, 0
      %p49 = por %p47, %p48
      %p50 = scmp.ne.s32.totalorder %s39, %s42
      %p51 = scmp.eq.s32.totalorder %s22, 5
      %p52 = por %p50, %p51
      %p53 = scmp.ne.s32.totalorder %s42, %s43
      %p54 = scmp.eq.s32.totalorder %s22, 0
      %p55 = por %p53, %p54
      %p56 = scmp.ne.s32.totalorder %s42, %s43
      %p57 = scmp.eq.s32.totalorder %s23, 5
      %p58 = por %p56, %p57
      %p60 = scmp.ne.s32.totalorder %s43, %s59
      %p61 = scmp.eq.s32.totalorder %s23, 0
      %p62 = por %p60, %p61
      %s64 = sadd.s32 %s63, 1
      %p67 = scmp.eq.s32.totalorder %s17, 5
      %p68 = scmp.ne.s32.totalorder %s63, %s65
      %p69 = scmp.eq.s32.totalorder %s17, 0
      %p70 = por %p68, %p69
      %p71 = scmp.ne.s32.totalorder %s63, %s65
      %p72 = scmp.eq.s32.totalorder %s22, 5
      %p73 = por %p71, %p72
      %p74 = scmp.ne.s32.totalorder %s65, %s66
      %p75 = scmp.eq.s32.totalorder %s22, 0
      %p76 = por %p74, %p75
      %p77 = scmp.ne.s32.totalorder %s65, %s66
      %p78 = scmp.eq.s32.totalorder %s23, 5
      %p79 = por %p77, %p78
      %p81 = scmp.ne.s32.totalorder %s66, %s80
      %p82 = scmp.eq.s32.totalorder %s23, 0
      %p83 = por %p81, %p82
      %s85 = sadd.s32 %s84, 1
      %p88 = scmp.eq.s32.totalorder %s17, 5
      %p89 = scmp.ne.s32.totalorder %s84, %s86
      %p90 = scmp.eq.s32.totalorder %s17, 0
      %p91 = por %p89, %p90
      %p92 = scmp.ne.s32.totalorder %s84, %s86
      %p93 = scmp.eq.s32.totalorder %s22, 5
      %p94 = por %p92, %p93
      %p95 = scmp.ne.s32.totalorder %s86, %s87
      %p96 = scmp.eq.s32.totalorder %s22, 0
      %p97 = por %p95, %p96
      %p98 = scmp.ne.s32.totalorder %s86, %s87
      %p99 = scmp.eq.s32.totalorder %s23, 5
      %p100 = por %p98, %p99
      %p102 = scmp.ne.s32.totalorder %s87, %s101
      %p103 = scmp.eq.s32.totalorder %s23, 0
      %p104 = por %p102, %p103
      %s106 = sadd.s32 %s105, 1
      %p109 = scmp.eq.s32.totalorder %s17, 5
      %p110 = scmp.ne.s32.totalorder %s105, %s107
      %p111 = scmp.eq.s32.totalorder %s17, 0
      %p112 = por %p110, %p111
      %p113 = scmp.ne.s32.totalorder %s105, %s107
      %p114 = scmp.eq.s32.totalorder %s22, 5
      %p115 = por %p113, %p114
      %p116 = scmp.ne.s32.totalorder %s107, %s108
      %p117 = scmp.eq.s32.totalorder %s22, 0
      %p118 = por %p116, %p117
      %p119 = scmp.ne.s32.totalorder %s107, %s108
      %p120 = scmp.eq.s32.totalorder %s23, 5
      %p121 = por %p119, %p120
      %p123 = scmp.ne.s32.totalorder %s108, %s122
      %p124 = scmp.eq.s32.totalorder %s23, 0
      %p125 = por %p123, %p124
      %s127 = sadd.s32 %s126, 1
      %p130 = scmp.eq.s32.totalorder %s17, 5
      %p131 = scmp.ne.s32.totalorder %s126, %s128
      %p132 = scmp.eq.s32.totalorder %s17, 0
      %p133 = por %p131, %p132
      %p134 = scmp.ne.s32.totalorder %s126, %s128
      %p135 = scmp.eq.s32.totalorder %s22, 5
      %p136 = por %p134, %p135
      %p137 = scmp.ne.s32.totalorder %s128, %s129
      %p138 = scmp.eq.s32.totalorder %s22, 0
      %p139 = por %p137, %p138
      %p140 = scmp.ne.s32.totalorder %s128, %s129
      %p141 = scmp.eq.s32.totalorder %s23, 5
      %p142 = por %p140, %p141
      %p144 = scmp.ne.s32.totalorder %s129, %s143
      %p145 = scmp.eq.s32.totalorder %s23, 0
      %p146 = por %p144, %p145
      %s148 = sadd.s32 %s147, 1
      %p151 = scmp.eq.s32.totalorder %s17, 5
      %p152 = scmp.ne.s32.totalorder %s147, %s149
      %p153 = scmp.eq.s32.totalorder %s17, 0
      %p154 = por %p152, %p153
      %p155 = scmp.ne.s32.totalorder %s147, %s149
      %p156 = scmp.eq.s32.totalorder %s22, 5
      %p157 = por %p155, %p156
      %p158 = scmp.ne.s32.totalorder %s149, %s150
      %p159 = scmp.eq.s32.totalorder %s22, 0
      %p160 = por %p158, %p159
      %p161 = scmp.ne.s32.totalorder %s149, %s150
      %p162 = scmp.eq.s32.totalorder %s23, 5
      %p163 = por %p161, %p162
      %p165 = scmp.ne.s32.totalorder %s150, %s164
      %p166 = scmp.eq.s32.totalorder %s23, 0
      %p167 = por %p165, %p166
      %s169 = sadd.s32 %s168, 1
      %p172 = scmp.eq.s32.totalorder %s17, 5
      %p173 = scmp.ne.s32.totalorder %s168, %s170
      %p174 = scmp.eq.s32.totalorder %s17, 0
      %p175 = por %p173, %p174
      %p176 = scmp.ne.s32.totalorder %s168, %s170
      %p177 = scmp.eq.s32.totalorder %s22, 5
      %p178 = por %p176, %p177
      %p179 = scmp.ne.s32.totalorder %s170, %s171
      %p180 = scmp.eq.s32.totalorder %s22, 0
      %p181 = por %p179, %p180
      %p182 = scmp.ne.s32.totalorder %s170, %s171
      %p183 = scmp.eq.s32.totalorder %s23, 5
      %p184 = por %p182, %p183
      %p186 = scmp.ne.s32.totalorder %s171, %s185
      %p187 = scmp.eq.s32.totalorder %s23, 0
      %p188 = por %p186, %p187
      %s189 = ssub.s32 %s25, %s32
      %p190 = scmp.eq.s32.totalorder %s189, 0
      %s192 = sadd.s32 %s191, 1
      %s193 = scalar_select %p190, %s191, %s192
      %p196 = pneg %p190
      %p197 = scmp.eq.s32.totalorder %s17, 5
      %p198 = por %p196, %p197
      %p199 = scmp.ne.s32.totalorder %s191, %s194
      %p200 = scmp.eq.s32.totalorder %s17, 0
      %p201 = por %p199, %p200
      %p202 = scmp.ne.s32.totalorder %s191, %s194
      %p203 = scmp.eq.s32.totalorder %s22, 5
      %p204 = por %p202, %p203
      %p205 = scmp.ne.s32.totalorder %s194, %s195
      %p206 = scmp.eq.s32.totalorder %s22, 0
      %p207 = por %p205, %p206
      %p208 = scmp.ne.s32.totalorder %s194, %s195
      %p209 = scmp.eq.s32.totalorder %s23, 5
      %p210 = por %p208, %p209
      %p212 = scmp.ne.s32.totalorder %s195, %s211
      %p213 = scmp.eq.s32.totalorder %s23, 0
      %p214 = por %p212, %p213
      %s215 = ssub.s32 %s24, %s36
      %s216 = ssub.s32 %s25, %s32
      %s217 = sor.u32 %s215, %s216
      %p218 = scmp.eq.s32.totalorder %s217, 0
      %s220 = sadd.s32 %s219, 1
      %s221 = scalar_select %p218, %s219, %s220
      %p224 = pneg %p218
      %p225 = scmp.eq.s32.totalorder %s17, 5
      %p226 = por %p224, %p225
      %p227 = scmp.ne.s32.totalorder %s219, %s222
      %p228 = scmp.eq.s32.totalorder %s17, 0
      %p229 = por %p227, %p228
      %p230 = scmp.ne.s32.totalorder %s219, %s222
      %p231 = scmp.eq.s32.totalorder %s22, 5
      %p232 = por %p230, %p231
      %p233 = scmp.ne.s32.totalorder %s222, %s223
      %p234 = scmp.eq.s32.totalorder %s22, 0
      %p235 = por %p233, %p234
      %p236 = scmp.ne.s32.totalorder %s222, %s223
      %p237 = scmp.eq.s32.totalorder %s23, 5
      %p238 = por %p236, %p237
      %p240 = scmp.ne.s32.totalorder %s223, %s239
      %p241 = scmp.eq.s32.totalorder %s23, 0
      %p242 = por %p240, %p241
      %p243 = scmp.le.s32.totalorder 1, %s17
      %p244 = scmp.lt.s32.totalorder %s17, 7
      %p245 = pnand %p243, %p244
      %p246 = pneg %p245
      // Predicated region
      $region9: #{tpu_custom_call.1} parent=5 // pred_check
        _
      $region10: #{tpu_custom_call.1} parent=5 // pred_check_branch
        %248 = sbr.rel (%p245) target = $region12
      $region11: #{tpu_custom_call.1} parent=5 // pred_region
        %s249 = ssub.s32 %s17, 1
        // Predicated region
        $region13: #{tpu_custom_call.1} parent=11 // pred_check
          %p250 = pneg %p76
        $region14: #{tpu_custom_call.1} parent=11 // pred_check_branch
          %252 = sbr.rel (%p250) target = $region16
        $region15: #{tpu_custom_call.1} parent=11 // pred_region
          _
        $region16: #{tpu_custom_call.1} parent=11 // pred_fallthru
          _
        // Predicated region
        $region17: #{tpu_custom_call.1} parent=11 // pred_check
          %p253 = pneg %p97
        $region18: #{tpu_custom_call.1} parent=11 // pred_check_branch
          %255 = sbr.rel (%p253) target = $region20
        $region19: #{tpu_custom_call.1} parent=11 // pred_region
          _
        $region20: #{tpu_custom_call.1} parent=11 // pred_fallthru
          _
        // Predicated region
        $region21: #{tpu_custom_call.1} parent=11 // pred_check
          %p256 = pneg %p118
        $region22: #{tpu_custom_call.1} parent=11 // pred_check_branch
          %258 = sbr.rel (%p256) target = $region24
        $region23: #{tpu_custom_call.1} parent=11 // pred_region
          _
        $region24: #{tpu_custom_call.1} parent=11 // pred_fallthru
          _
        // Predicated region
        $region25: #{tpu_custom_call.1} parent=11 // pred_check
          %p259 = pneg %p139
        $region26: #{tpu_custom_call.1} parent=11 // pred_check_branch
          %261 = sbr.rel (%p259) target = $region28
        $region27: #{tpu_custom_call.1} parent=11 // pred_region
          _
        $region28: #{tpu_custom_call.1} parent=11 // pred_fallthru
          _
        // Predicated region
        $region29: #{tpu_custom_call.1} parent=11 // pred_check
          %p262 = pneg %p160
        $region30: #{tpu_custom_call.1} parent=11 // pred_check_branch
          %264 = sbr.rel (%p262) target = $region32
        $region31: #{tpu_custom_call.1} parent=11 // pred_region
          _
        $region32: #{tpu_custom_call.1} parent=11 // pred_fallthru
          _
        // Predicated region
        $region33: #{tpu_custom_call.1} parent=11 // pred_check
          %p265 = pneg %p181
        $region34: #{tpu_custom_call.1} parent=11 // pred_check_branch
          %267 = sbr.rel (%p265) target = $region36
        $region35: #{tpu_custom_call.1} parent=11 // pred_region
          _
        $region36: #{tpu_custom_call.1} parent=11 // pred_fallthru
          _
      $region12: #{tpu_custom_call.1} parent=5 // pred_fallthru
        _
      %p268 = scmp.lt.s32.totalorder %s17, 6
      // Predicated region
      $region37: #{tpu_custom_call.1} parent=5 // pred_check
        %p269 = pneg %p268
      $region38: #{tpu_custom_call.1} parent=5 // pred_check_branch
        %271 = sbr.rel (%p269) target = $region40
      $region39: #{tpu_custom_call.1} parent=5 // pred_region
        // Predicated region
        $region41: #{tpu_custom_call.1} parent=39 // pred_check
          %p272 = pneg %p49
        $region42: #{tpu_custom_call.1} parent=39 // pred_check_branch
          %274 = sbr.rel (%p272) target = $region44
        $region43: #{tpu_custom_call.1} parent=39 // pred_region
          %s275 = smul.u32 32, %s24
          %p276 = scmp.lt.s32.totalorder %s275, 95
          %s277 = scalar_select %p276, %s275, 95
          %s278 = smul.addr %s277, 8
          %s279 = scalar_lea.vmem %s0, %s278
          %s280 = smul.u32 32, %s24
        $region44: #{tpu_custom_call.1} parent=39 // pred_fallthru
          _
        // Predicated region
        $region45: #{tpu_custom_call.1} parent=39 // pred_check
          %p281 = pneg %p201
        $region46: #{tpu_custom_call.1} parent=39 // pred_check_branch
          %283 = sbr.rel (%p281) target = $region48
        $region47: #{tpu_custom_call.1} parent=39 // pred_region
          %s284 = sand.u32 %s191, 1
          %s285 = sand.u32 %s191, 1
          %s286 = smul.addr %s285, 64
          %s287 = scalar_lea.vmem [#allocation3], %s286
          %s288 = smul.addr %s25, 8
          %s289 = scalar_lea.vmem %s7, %s288
          // Predicated region
          $region49: #{tpu_custom_call.1} parent=47 // pred_check
            _
          $region50: #{tpu_custom_call.1} parent=47 // pred_check_branch
            %291 = sbr.rel (0) target = $region52
          $region51: #{tpu_custom_call.1} parent=47 // pred_region
            // Predicated region
            $region53: #{tpu_custom_call.1} parent=51 // pred_check
              _
            $region54: #{tpu_custom_call.1} parent=51 // pred_check_branch
              %293 = sbr.rel (0) target = $region56
            $region55: #{tpu_custom_call.1} parent=51 // pred_region
              // Predicated region
              $region68: #{tpu_custom_call.1} parent=55 // pred_check
                _
              $region69: #{tpu_custom_call.1} parent=55 // pred_check_branch
                %323 = sbr.rel (0) target = $region71
              $region70: #{tpu_custom_call.1} parent=55 // pred_region
                loop: start=0, step=1, limit=1
                $region72: #{tpu_custom_call.1} parent=70 // loop_pre_header
                  _
                $region73: #{tpu_custom_call.1} parent=70 // loop_header
                  %s325 = sphi 0, %s329
                  %p326 = scmp.ge.s32.totalorder %s325, 1
                  %s330 = sphi %s289, %s289
                  %s331 = sphi %s287, %s287
                $region74: #{tpu_custom_call.1} parent=70 // loop_header_branch
                  %328 = sbr.rel (%p326) target = $region78
                $region75: #{tpu_custom_call.1} parent=70 // loop_body
                  %v332 = vld [vmem:[%s330] sm:$0xff]
                  %333 = vst [vmem:[%s331] sm:$0xff] %v332
                  %v334 = vld [vmem:[%s330 + $0x10] sm:$0xff]
                  %335 = vst [vmem:[%s331 + $0x8] sm:$0xff] %v334
                  %v336 = vld [vmem:[%s330 + $0x20] sm:$0xff]
                  %337 = vst [vmem:[%s331 + $0x10] sm:$0xff] %v336
                  %v338 = vld [vmem:[%s330 + $0x30] sm:$0xff]
                  %339 = vst [vmem:[%s331 + $0x18] sm:$0xff] %v338
                  %v340 = vld [vmem:[%s330 + $0x40] sm:$0xff]
                  %341 = vst [vmem:[%s331 + $0x20] sm:$0xff] %v340
                  %v342 = vld [vmem:[%s330 + $0x50] sm:$0xff]
                  %343 = vst [vmem:[%s331 + $0x28] sm:$0xff] %v342
                  %v344 = vld [vmem:[%s330 + $0x60] sm:$0xff]
                  %345 = vst [vmem:[%s331 + $0x30] sm:$0xff] %v344
                  %v346 = vld [vmem:[%s330 + $0x70] sm:$0xff]
                  %347 = vst [vmem:[%s331 + $0x38] sm:$0xff] %v346
                $region76: #{tpu_custom_call.1} parent=70 // loop_footer
                  %s329 = sadd.s32 1, %s325
                $region77: #{tpu_custom_call.1} parent=70 // loop_footer_branch
                  %324 = sbr.rel target = $region73
                $region78: #{tpu_custom_call.1} parent=70 // loop_exit
                  _
              $region71: #{tpu_custom_call.1} parent=55 // pred_fallthru
                _
              // Predicated region
              $region79: #{tpu_custom_call.1} parent=55 // pred_check
                _
              $region80: #{tpu_custom_call.1} parent=55 // pred_check_branch
                %349 = sbr.rel target = $region82
              $region81: #{tpu_custom_call.1} parent=55 // pred_region
                _
              $region82: #{tpu_custom_call.1} parent=55 // pred_fallthru
                _
            $region56: #{tpu_custom_call.1} parent=51 // pred_fallthru
              _
            // Predicated region
            $region57: #{tpu_custom_call.1} parent=51 // pred_check
              _
            $region58: #{tpu_custom_call.1} parent=51 // pred_check_branch
              %295 = sbr.rel target = $region60
            $region59: #{tpu_custom_call.1} parent=51 // pred_region
              %s297 = ssub.s32 256, 1
              loop: start=0, step=1, limit=1
              $region61: #{tpu_custom_call.1} parent=59 // loop_pre_header
                _
              $region62: #{tpu_custom_call.1} parent=59 // loop_header
                %s299 = sphi 0, %s303
                %p300 = scmp.ge.s32.totalorder %s299, 1
                %s304 = sphi %s289, %s289
                %s305 = sphi %s287, %s287
              $region63: #{tpu_custom_call.1} parent=59 // loop_header_branch
                %302 = sbr.rel (%p300) target = $region67
              $region64: #{tpu_custom_call.1} parent=59 // loop_body
                %v306 = vld [vmem:[%s304] sm:%s297]
                %307 = vst [vmem:[%s305] sm:%s297] %v306
                %v308 = vld [vmem:[%s304 + $0x10] sm:%s297]
                %309 = vst [vmem:[%s305 + $0x8] sm:%s297] %v308
                %v310 = vld [vmem:[%s304 + $0x20] sm:%s297]
                %311 = vst [vmem:[%s305 + $0x10] sm:%s297] %v310
                %v312 = vld [vmem:[%s304 + $0x30] sm:%s297]
                %313 = vst [vmem:[%s305 + $0x18] sm:%s297] %v312
                %v314 = vld [vmem:[%s304 + $0x40] sm:%s297]
                %315 = vst [vmem:[%s305 + $0x20] sm:%s297] %v314
                %v316 = vld [vmem:[%s304 + $0x50] sm:%s297]
                %317 = vst [vmem:[%s305 + $0x28] sm:%s297] %v316
                %v318 = vld [vmem:[%s304 + $0x60] sm:%s297]
                %319 = vst [vmem:[%s305 + $0x30] sm:%s297] %v318
                %v320 = vld [vmem:[%s304 + $0x70] sm:%s297]
                %321 = vst [vmem:[%s305 + $0x38] sm:%s297] %v320
              $region65: #{tpu_custom_call.1} parent=59 // loop_footer
                %s303 = sadd.s32 1, %s299
              $region66: #{tpu_custom_call.1} parent=59 // loop_footer_branch
                %298 = sbr.rel target = $region62
              $region67: #{tpu_custom_call.1} parent=59 // loop_exit
                _
            $region60: #{tpu_custom_call.1} parent=51 // pred_fallthru
              _
          $region52: #{tpu_custom_call.1} parent=47 // pred_fallthru
            _
          %350 = vnop
        $region48: #{tpu_custom_call.1} parent=39 // pred_fallthru
          _
      $region40: #{tpu_custom_call.1} parent=5 // pred_fallthru
        _
      %p351 = scmp.le.s32.totalorder 1, %s17
      %p352 = scmp.lt.s32.totalorder %s17, 7
      %p353 = pnand %p351, %p352
      %p354 = pneg %p353
      // Predicated region
      $region83: #{tpu_custom_call.1} parent=5 // pred_check
        _
      $region84: #{tpu_custom_call.1} parent=5 // pred_check_branch
        %356 = sbr.rel (%p353) target = $region86
      $region85: #{tpu_custom_call.1} parent=5 // pred_region
        %s357 = ssub.s32 %s17, 1
        %s358 = sand.u32 %s194, 1
        %s359 = sand.u32 %s194, 1
        %s360 = smul.addr %s359, 64
        %s361 = scalar_lea.vmem [#allocation3], %s360
        // Predicated region
        $region87: #{tpu_custom_call.1} parent=85 // pred_check
          %p362 = pneg %p207
        $region88: #{tpu_custom_call.1} parent=85 // pred_check_branch
          %364 = sbr.rel (%p362) target = $region90
        $region89: #{tpu_custom_call.1} parent=85 // pred_region
          _
        $region90: #{tpu_custom_call.1} parent=85 // pred_fallthru
          _
        %s365 = smul.u32 32, %s26
        %p366 = scmp.lt.s32.totalorder %s365, 95
        %s367 = scalar_select %p366, %s365, 95
        %s368 = smul.addr %s367, 8
        %s369 = scalar_lea.vmem %s0, %s368
        %p370 = pneg %p55
        %p371 = pneg %p52
        %p372 = pneg %p76
        %p373 = pneg %p73
        %p374 = pneg %p97
        %p375 = pneg %p94
        %p376 = pneg %p118
        %p377 = pneg %p115
        %p378 = pneg %p139
        %p379 = pneg %p136
        %p380 = pneg %p160
        %p381 = pneg %p157
        %p382 = pneg %p181
        %p383 = pneg %p178
        %s384 = sand.u32 %s194, 1
        %s385 = sand.u32 %s194, 1
        %s386 = smul.addr %s385, 64
        %s387 = scalar_lea.vmem [#allocation3], %s386
        %p388 = pneg %p207
        %p389 = pneg %p204
        %p390 = pneg %p235
        %p391 = pneg %p232
        %s392 = sand.u32 %s222, 1
        %s393 = scalar_lea.sflag [#allocation5], %s392
        %s394 = sand.u32 %s222, 1
        %s395 = smul.addr %s394, 256
        %s396 = scalar_lea.vmem [#allocation4], %s395
        %s397 = smul.u32 32, %s26
        %p398 = scmp.lt.s32.totalorder %s397, 95
        %s399 = scalar_select %p398, %s397, 95
        %s400 = smul.addr %s399, 8
        %s401 = scalar_lea.vmem %s0, %s400
        %s402 = smul.u32 32, %s26
        %s403 = smul.u32 32, %s26
        %p404 = scmp.eq.s32.totalorder %s27, 0
        // Predicated region
        $region91: #{tpu_custom_call.1} parent=85 // pred_check
          %p405 = pneg %p404
        $region92: #{tpu_custom_call.1} parent=85 // pred_check_branch
          %407 = sbr.rel (%p405) target = $region94
        $region93: #{tpu_custom_call.1} parent=85 // pred_region
          %v408 = vld [vmem:[%s401] sm:$0xff]
          %v409 = vld [vmem:[%s401 + $0x8] sm:$0xff]
          %v410 = vld [vmem:[%s401 + $0x10] sm:$0xff]
          %v411 = vld [vmem:[%s401 + $0x18] sm:$0xff]
          %v412 = vld [vmem:[%s401 + $0x20] sm:$0xff]
          %v413 = vld [vmem:[%s401 + $0x28] sm:$0xff]
          %v414 = vld [vmem:[%s401 + $0x30] sm:$0xff]
          %v415 = vld [vmem:[%s401 + $0x38] sm:$0xff]
          %v416 = vld [vmem:[%s401 + $0x40] sm:$0xff]
          %v417 = vld [vmem:[%s401 + $0x48] sm:$0xff]
          %v418 = vld [vmem:[%s401 + $0x50] sm:$0xff]
          %v419 = vld [vmem:[%s401 + $0x58] sm:$0xff]
          %v420 = vld [vmem:[%s401 + $0x60] sm:$0xff]
          %v421 = vld [vmem:[%s401 + $0x68] sm:$0xff]
          %v422 = vld [vmem:[%s401 + $0x70] sm:$0xff]
          %v423 = vld [vmem:[%s401 + $0x78] sm:$0xff]
          %v424 = vld [vmem:[%s401 + $0x80] sm:$0xff]
          %v425 = vld [vmem:[%s401 + $0x88] sm:$0xff]
          %v426 = vld [vmem:[%s401 + $0x90] sm:$0xff]
          %v427 = vld [vmem:[%s401 + $0x98] sm:$0xff]
          %v428 = vld [vmem:[%s401 + $0xa0] sm:$0xff]
          %v429 = vld [vmem:[%s401 + $0xa8] sm:$0xff]
          %v430 = vld [vmem:[%s401 + $0xb0] sm:$0xff]
          %v431 = vld [vmem:[%s401 + $0xb8] sm:$0xff]
          %v432 = vld [vmem:[%s401 + $0xc0] sm:$0xff]
          %v433 = vld [vmem:[%s401 + $0xc8] sm:$0xff]
          %v434 = vld [vmem:[%s401 + $0xd0] sm:$0xff]
          %v435 = vld [vmem:[%s401 + $0xd8] sm:$0xff]
          %v436 = vld [vmem:[%s401 + $0xe0] sm:$0xff]
          %v437 = vld [vmem:[%s401 + $0xe8] sm:$0xff]
          %v438 = vld [vmem:[%s401 + $0xf0] sm:$0xff]
          %v439 = vld [vmem:[%s401 + $0xf8] sm:$0xff]
          %v440 = vld [vmem:[%s1] sm:$0x7]
          %vm441 = vcmask 23552
          %v443 = vsel %vm441, %v408, 0
          %v446 = vsel %vm441, %v409, 0
          %v449 = vsel %vm441, %v410, 0
          %v452 = vsel %vm441, %v411, 0
          %v455 = vsel %vm441, %v412, 0
          %v458 = vsel %vm441, %v413, 0
          %v461 = vsel %vm441, %v414, 0
          %v464 = vsel %vm441, %v415, 0
          %v467 = vsel %vm441, %v416, 0
          %v470 = vsel %vm441, %v417, 0
          %v473 = vsel %vm441, %v418, 0
          %v476 = vsel %vm441, %v419, 0
          %v479 = vsel %vm441, %v420, 0
          %v482 = vsel %vm441, %v421, 0
          %v485 = vsel %vm441, %v422, 0
          %v488 = vsel %vm441, %v423, 0
          %v491 = vsel %vm441, %v424, 0
          %v494 = vsel %vm441, %v425, 0
          %v497 = vsel %vm441, %v426, 0
          %v500 = vsel %vm441, %v427, 0
          %v503 = vsel %vm441, %v428, 0
          %v506 = vsel %vm441, %v429, 0
          %v509 = vsel %vm441, %v430, 0
          %v512 = vsel %vm441, %v431, 0
          %v515 = vsel %vm441, %v432, 0
          %v518 = vsel %vm441, %v433, 0
          %v521 = vsel %vm441, %v434, 0
          %v524 = vsel %vm441, %v435, 0
          %v527 = vsel %vm441, %v436, 0
          %v530 = vsel %vm441, %v437, 0
          %v533 = vsel %vm441, %v438, 0
          %v536 = vsel %vm441, %v439, 0
          %vm538 = vcmask 1042432
          %v540 = vsel %vm538, %v440, 0
          %542 = vmatpush.msra.mxu0 0.0
          %543 = vmatpush.msra.mxu0 0.0
          %544 = vmatpush.msra.mxu0 0.0
          %545 = vmatpush.msra.mxu0 0.0
          %546 = vmatpush.msra.mxu0 0.0
          %547 = vmatpush.msra.mxu0 0.0
          %548 = vmatpush.msra.mxu0 0.0
          %549 = vmatpush.msra.mxu0 0.0
          %550 = vmatpush.msra.mxu0 0.0
          %551 = vmatpush.msra.mxu0 0.0
          %552 = vmatpush.msra.mxu0 0.0
          %553 = vmatpush.msra.mxu0 0.0
          %554 = vmatpush.msra.mxu0 0.0
          %555 = vmatpush.msra.mxu0 0.0
          %556 = vmatpush.msra.mxu0 0.0
          %557 = vmatpush.msra.mxu0 %v540
          %558 = vmatmul.f32.gmra.mxu0 %v443
          %v559 = vpop.f32.mrf.mxu0
          %v560 = vadd.f32 0.0, %v559
          %561 = vmatmul.f32.gmra.mxu0 %v446
          %v562 = vpop.f32.mrf.mxu0
          %v563 = vadd.f32 0.0, %v562
          %564 = vmatmul.f32.gmra.mxu0 %v449
          %v565 = vpop.f32.mrf.mxu0
          %v566 = vadd.f32 0.0, %v565
          %567 = vmatmul.f32.gmra.mxu0 %v452
          %v568 = vpop.f32.mrf.mxu0
          %v569 = vadd.f32 0.0, %v568
          %570 = vmatmul.f32.gmra.mxu0 %v455
          %v571 = vpop.f32.mrf.mxu0
          %v572 = vadd.f32 0.0, %v571
          %573 = vmatmul.f32.gmra.mxu0 %v458
          %v574 = vpop.f32.mrf.mxu0
          %v575 = vadd.f32 0.0, %v574
          %576 = vmatmul.f32.gmra.mxu0 %v461
          %v577 = vpop.f32.mrf.mxu0
          %v578 = vadd.f32 0.0, %v577
          %579 = vmatmul.f32.gmra.mxu0 %v464
          %v580 = vpop.f32.mrf.mxu0
          %v581 = vadd.f32 0.0, %v580
          %582 = vmatmul.f32.gmra.mxu0 %v467
          %v583 = vpop.f32.mrf.mxu0
          %v584 = vadd.f32 0.0, %v583
          %585 = vmatmul.f32.gmra.mxu0 %v470
          %v586 = vpop.f32.mrf.mxu0
          %v587 = vadd.f32 0.0, %v586
          %588 = vmatmul.f32.gmra.mxu0 %v473
          %v589 = vpop.f32.mrf.mxu0
          %v590 = vadd.f32 0.0, %v589
          %591 = vmatmul.f32.gmra.mxu0 %v476
          %v592 = vpop.f32.mrf.mxu0
          %v593 = vadd.f32 0.0, %v592
          %594 = vmatmul.f32.gmra.mxu0 %v479
          %v595 = vpop.f32.mrf.mxu0
          %v596 = vadd.f32 0.0, %v595
          %597 = vmatmul.f32.gmra.mxu0 %v482
          %v598 = vpop.f32.mrf.mxu0
          %v599 = vadd.f32 0.0, %v598
          %600 = vmatmul.f32.gmra.mxu0 %v485
          %v601 = vpop.f32.mrf.mxu0
          %v602 = vadd.f32 0.0, %v601
          %603 = vmatmul.f32.gmra.mxu0 %v488
          %v604 = vpop.f32.mrf.mxu0
          %v605 = vadd.f32 0.0, %v604
          %606 = vmatmul.f32.gmra.mxu0 %v491
          %v607 = vpop.f32.mrf.mxu0
          %v608 = vadd.f32 0.0, %v607
          %609 = vmatmul.f32.gmra.mxu0 %v494
          %v610 = vpop.f32.mrf.mxu0
          %v611 = vadd.f32 0.0, %v610
          %612 = vmatmul.f32.gmra.mxu0 %v497
          %v613 = vpop.f32.mrf.mxu0
          %v614 = vadd.f32 0.0, %v613
          %615 = vmatmul.f32.gmra.mxu0 %v500
          %v616 = vpop.f32.mrf.mxu0
          %v617 = vadd.f32 0.0, %v616
          %618 = vmatmul.f32.gmra.mxu0 %v503
          %v619 = vpop.f32.mrf.mxu0
          %v620 = vadd.f32 0.0, %v619
          %621 = vmatmul.f32.gmra.mxu0 %v506
          %v622 = vpop.f32.mrf.mxu0
          %v623 = vadd.f32 0.0, %v622
          %624 = vmatmul.f32.gmra.mxu0 %v509
          %v625 = vpop.f32.mrf.mxu0
          %v626 = vadd.f32 0.0, %v625
          %627 = vmatmul.f32.gmra.mxu0 %v512
          %v628 = vpop.f32.mrf.mxu0
          %v629 = vadd.f32 0.0, %v628
          %630 = vmatmul.f32.gmra.mxu0 %v515
          %v631 = vpop.f32.mrf.mxu0
          %v632 = vadd.f32 0.0, %v631
          %633 = vmatmul.f32.gmra.mxu0 %v518
          %v634 = vpop.f32.mrf.mxu0
          %v635 = vadd.f32 0.0, %v634
          %636 = vmatmul.f32.gmra.mxu0 %v521
          %v637 = vpop.f32.mrf.mxu0
          %v638 = vadd.f32 0.0, %v637
          %639 = vmatmul.f32.gmra.mxu0 %v524
          %v640 = vpop.f32.mrf.mxu0
          %v641 = vadd.f32 0.0, %v640
          %642 = vmatmul.f32.gmra.mxu0 %v527
          %v643 = vpop.f32.mrf.mxu0
          %v644 = vadd.f32 0.0, %v643
          %645 = vmatmul.f32.gmra.mxu0 %v530
          %v646 = vpop.f32.mrf.mxu0
          %v647 = vadd.f32 0.0, %v646
          %648 = vmatmul.f32.gmra.mxu0 %v533
          %v649 = vpop.f32.mrf.mxu0
          %v650 = vadd.f32 0.0, %v649
          %651 = vmatmul.f32.gmra.mxu0 %v536
          %v652 = vpop.f32.mrf.mxu0
          %v653 = vadd.f32 0.0, %v652
          %654 = vdwg.mxu0
          %vm655 = vcmp.ge.f32.partialorder %v560, 0.0
          %vm656 = vcmp.ge.f32.partialorder %v563, 0.0
          %vm657 = vcmp.ge.f32.partialorder %v566, 0.0
          %vm658 = vcmp.ge.f32.partialorder %v569, 0.0
          %vm659 = vcmp.ge.f32.partialorder %v572, 0.0
          %vm660 = vcmp.ge.f32.partialorder %v575, 0.0
          %vm661 = vcmp.ge.f32.partialorder %v578, 0.0
          %vm662 = vcmp.ge.f32.partialorder %v581, 0.0
          %vm663 = vcmp.ge.f32.partialorder %v584, 0.0
          %vm664 = vcmp.ge.f32.partialorder %v587, 0.0
          %vm665 = vcmp.ge.f32.partialorder %v590, 0.0
          %vm666 = vcmp.ge.f32.partialorder %v593, 0.0
          %vm667 = vcmp.ge.f32.partialorder %v596, 0.0
          %vm668 = vcmp.ge.f32.partialorder %v599, 0.0
          %vm669 = vcmp.ge.f32.partialorder %v602, 0.0
          %vm670 = vcmp.ge.f32.partialorder %v605, 0.0
          %vm671 = vcmp.ge.f32.partialorder %v608, 0.0
          %vm672 = vcmp.ge.f32.partialorder %v611, 0.0
          %vm673 = vcmp.ge.f32.partialorder %v614, 0.0
          %vm674 = vcmp.ge.f32.partialorder %v617, 0.0
          %vm675 = vcmp.ge.f32.partialorder %v620, 0.0
          %vm676 = vcmp.ge.f32.partialorder %v623, 0.0
          %vm677 = vcmp.ge.f32.partialorder %v626, 0.0
          %vm678 = vcmp.ge.f32.partialorder %v629, 0.0
          %vm679 = vcmp.ge.f32.partialorder %v632, 0.0
          %vm680 = vcmp.ge.f32.partialorder %v635, 0.0
          %vm681 = vcmp.ge.f32.partialorder %v638, 0.0
          %vm682 = vcmp.ge.f32.partialorder %v641, 0.0
          %vm683 = vcmp.ge.f32.partialorder %v644, 0.0
          %vm684 = vcmp.ge.f32.partialorder %v647, 0.0
          %vm685 = vcmp.ge.f32.partialorder %v650, 0.0
          %vm686 = vcmp.ge.f32.partialorder %v653, 0.0
          %v687 = vmul.f32 %v560, 0.01
          %v688 = vmul.f32 %v563, 0.01
          %v689 = vmul.f32 %v566, 0.01
          %v690 = vmul.f32 %v569, 0.01
          %v691 = vmul.f32 %v572, 0.01
          %v692 = vmul.f32 %v575, 0.01
          %v693 = vmul.f32 %v578, 0.01
          %v694 = vmul.f32 %v581, 0.01
          %v695 = vmul.f32 %v584, 0.01
          %v696 = vmul.f32 %v587, 0.01
          %v697 = vmul.f32 %v590, 0.01
          %v698 = vmul.f32 %v593, 0.01
          %v699 = vmul.f32 %v596, 0.01
          %v700 = vmul.f32 %v599, 0.01
          %v701 = vmul.f32 %v602, 0.01
          %v702 = vmul.f32 %v605, 0.01
          %v703 = vmul.f32 %v608, 0.01
          %v704 = vmul.f32 %v611, 0.01
          %v705 = vmul.f32 %v614, 0.01
          %v706 = vmul.f32 %v617, 0.01
          %v707 = vmul.f32 %v620, 0.01
          %v708 = vmul.f32 %v623, 0.01
          %v709 = vmul.f32 %v626, 0.01
          %v710 = vmul.f32 %v629, 0.01
          %v711 = vmul.f32 %v632, 0.01
          %v712 = vmul.f32 %v635, 0.01
          %v713 = vmul.f32 %v638, 0.01
          %v714 = vmul.f32 %v641, 0.01
          %v715 = vmul.f32 %v644, 0.01
          %v716 = vmul.f32 %v647, 0.01
          %v717 = vmul.f32 %v650, 0.01
          %v718 = vmul.f32 %v653, 0.01
          %v719 = vsel %vm655, %v560, %v687
          %v720 = vsel %vm656, %v563, %v688
          %v721 = vsel %vm657, %v566, %v689
          %v722 = vsel %vm658, %v569, %v690
          %v723 = vsel %vm659, %v572, %v691
          %v724 = vsel %vm660, %v575, %v692
          %v725 = vsel %vm661, %v578, %v693
          %v726 = vsel %vm662, %v581, %v694
          %v727 = vsel %vm663, %v584, %v695
          %v728 = vsel %vm664, %v587, %v696
          %v729 = vsel %vm665, %v590, %v697
          %v730 = vsel %vm666, %v593, %v698
          %v731 = vsel %vm667, %v596, %v699
          %v732 = vsel %vm668, %v599, %v700
          %v733 = vsel %vm669, %v602, %v701
          %v734 = vsel %vm670, %v605, %v702
          %v735 = vsel %vm671, %v608, %v703
          %v736 = vsel %vm672, %v611, %v704
          %v737 = vsel %vm673, %v614, %v705
          %v738 = vsel %vm674, %v617, %v706
          %v739 = vsel %vm675, %v620, %v707
          %v740 = vsel %vm676, %v623, %v708
          %v741 = vsel %vm677, %v626, %v709
          %v742 = vsel %vm678, %v629, %v710
          %v743 = vsel %vm679, %v632, %v711
          %v744 = vsel %vm680, %v635, %v712
          %v745 = vsel %vm681, %v638, %v713
          %v746 = vsel %vm682, %v641, %v714
          %v747 = vsel %vm683, %v644, %v715
          %v748 = vsel %vm684, %v647, %v716
          %v749 = vsel %vm685, %v650, %v717
          %v750 = vsel %vm686, %v653, %v718
          %v751 = vld [vmem:[%s2] sm:$0xf]
          %vm752 = vcmask 31744
          %v754 = vsel %vm752, %v719, 0
          %v757 = vsel %vm752, %v720, 0
          %v760 = vsel %vm752, %v721, 0
          %v763 = vsel %vm752, %v722, 0
          %v766 = vsel %vm752, %v723, 0
          %v769 = vsel %vm752, %v724, 0
          %v772 = vsel %vm752, %v725, 0
          %v775 = vsel %vm752, %v726, 0
          %v778 = vsel %vm752, %v727, 0
          %v781 = vsel %vm752, %v728, 0
          %v784 = vsel %vm752, %v729, 0
          %v787 = vsel %vm752, %v730, 0
          %v790 = vsel %vm752, %v731, 0
          %v793 = vsel %vm752, %v732, 0
          %v796 = vsel %vm752, %v733, 0
          %v799 = vsel %vm752, %v734, 0
          %v802 = vsel %vm752, %v735, 0
          %v805 = vsel %vm752, %v736, 0
          %v808 = vsel %vm752, %v737, 0
          %v811 = vsel %vm752, %v738, 0
          %v814 = vsel %vm752, %v739, 0
          %v817 = vsel %vm752, %v740, 0
          %v820 = vsel %vm752, %v741, 0
          %v823 = vsel %vm752, %v742, 0
          %v826 = vsel %vm752, %v743, 0
          %v829 = vsel %vm752, %v744, 0
          %v832 = vsel %vm752, %v745, 0
          %v835 = vsel %vm752, %v746, 0
          %v838 = vsel %vm752, %v747, 0
          %v841 = vsel %vm752, %v748, 0
          %v844 = vsel %vm752, %v749, 0
          %v847 = vsel %vm752, %v750, 0
          %vm849 = vcmask 1043456
          %v851 = vsel %vm849, %v751, 0
          %853 = vmatpush.msra.mxu0 0.0
          %854 = vmatpush.msra.mxu0 0.0
          %855 = vmatpush.msra.mxu0 0.0
          %856 = vmatpush.msra.mxu0 0.0
          %857 = vmatpush.msra.mxu0 0.0
          %858 = vmatpush.msra.mxu0 0.0
          %859 = vmatpush.msra.mxu0 0.0
          %860 = vmatpush.msra.mxu0 0.0
          %861 = vmatpush.msra.mxu0 0.0
          %862 = vmatpush.msra.mxu0 0.0
          %863 = vmatpush.msra.mxu0 0.0
          %864 = vmatpush.msra.mxu0 0.0
          %865 = vmatpush.msra.mxu0 0.0
          %866 = vmatpush.msra.mxu0 0.0
          %867 = vmatpush.msra.mxu0 0.0
          %868 = vmatpush.msra.mxu0 %v851
          %869 = vmatmul.f32.gmra.mxu0 %v754
          %v870 = vpop.f32.mrf.mxu0
          %v871 = vadd.f32 0.0, %v870
          %872 = vmatmul.f32.gmra.mxu0 %v757
          %v873 = vpop.f32.mrf.mxu0
          %v874 = vadd.f32 0.0, %v873
          %875 = vmatmul.f32.gmra.mxu0 %v760
          %v876 = vpop.f32.mrf.mxu0
          %v877 = vadd.f32 0.0, %v876
          %878 = vmatmul.f32.gmra.mxu0 %v763
          %v879 = vpop.f32.mrf.mxu0
          %v880 = vadd.f32 0.0, %v879
          %881 = vmatmul.f32.gmra.mxu0 %v766
          %v882 = vpop.f32.mrf.mxu0
          %v883 = vadd.f32 0.0, %v882
          %884 = vmatmul.f32.gmra.mxu0 %v769
          %v885 = vpop.f32.mrf.mxu0
          %v886 = vadd.f32 0.0, %v885
          %887 = vmatmul.f32.gmra.mxu0 %v772
          %v888 = vpop.f32.mrf.mxu0
          %v889 = vadd.f32 0.0, %v888
          %890 = vmatmul.f32.gmra.mxu0 %v775
          %v891 = vpop.f32.mrf.mxu0
          %v892 = vadd.f32 0.0, %v891
          %893 = vmatmul.f32.gmra.mxu0 %v778
          %v894 = vpop.f32.mrf.mxu0
          %v895 = vadd.f32 0.0, %v894
          %896 = vmatmul.f32.gmra.mxu0 %v781
          %v897 = vpop.f32.mrf.mxu0
          %v898 = vadd.f32 0.0, %v897
          %899 = vmatmul.f32.gmra.mxu0 %v784
          %v900 = vpop.f32.mrf.mxu0
          %v901 = vadd.f32 0.0, %v900
          %902 = vmatmul.f32.gmra.mxu0 %v787
          %v903 = vpop.f32.mrf.mxu0
          %v904 = vadd.f32 0.0, %v903
          %905 = vmatmul.f32.gmra.mxu0 %v790
          %v906 = vpop.f32.mrf.mxu0
          %v907 = vadd.f32 0.0, %v906
          %908 = vmatmul.f32.gmra.mxu0 %v793
          %v909 = vpop.f32.mrf.mxu0
          %v910 = vadd.f32 0.0, %v909
          %911 = vmatmul.f32.gmra.mxu0 %v796
          %v912 = vpop.f32.mrf.mxu0
          %v913 = vadd.f32 0.0, %v912
          %914 = vmatmul.f32.gmra.mxu0 %v799
          %v915 = vpop.f32.mrf.mxu0
          %v916 = vadd.f32 0.0, %v915
          %917 = vmatmul.f32.gmra.mxu0 %v802
          %v918 = vpop.f32.mrf.mxu0
          %v919 = vadd.f32 0.0, %v918
          %920 = vmatmul.f32.gmra.mxu0 %v805
          %v921 = vpop.f32.mrf.mxu0
          %v922 = vadd.f32 0.0, %v921
          %923 = vmatmul.f32.gmra.mxu0 %v808
          %v924 = vpop.f32.mrf.mxu0
          %v925 = vadd.f32 0.0, %v924
          %926 = vmatmul.f32.gmra.mxu0 %v811
          %v927 = vpop.f32.mrf.mxu0
          %v928 = vadd.f32 0.0, %v927
          %929 = vmatmul.f32.gmra.mxu0 %v814
          %v930 = vpop.f32.mrf.mxu0
          %v931 = vadd.f32 0.0, %v930
          %932 = vmatmul.f32.gmra.mxu0 %v817
          %v933 = vpop.f32.mrf.mxu0
          %v934 = vadd.f32 0.0, %v933
          %935 = vmatmul.f32.gmra.mxu0 %v820
          %v936 = vpop.f32.mrf.mxu0
          %v937 = vadd.f32 0.0, %v936
          %938 = vmatmul.f32.gmra.mxu0 %v823
          %v939 = vpop.f32.mrf.mxu0
          %v940 = vadd.f32 0.0, %v939
          %941 = vmatmul.f32.gmra.mxu0 %v826
          %v942 = vpop.f32.mrf.mxu0
          %v943 = vadd.f32 0.0, %v942
          %944 = vmatmul.f32.gmra.mxu0 %v829
          %v945 = vpop.f32.mrf.mxu0
          %v946 = vadd.f32 0.0, %v945
          %947 = vmatmul.f32.gmra.mxu0 %v832
          %v948 = vpop.f32.mrf.mxu0
          %v949 = vadd.f32 0.0, %v948
          %950 = vmatmul.f32.gmra.mxu0 %v835
          %v951 = vpop.f32.mrf.mxu0
          %v952 = vadd.f32 0.0, %v951
          %953 = vmatmul.f32.gmra.mxu0 %v838
          %v954 = vpop.f32.mrf.mxu0
          %v955 = vadd.f32 0.0, %v954
          %956 = vmatmul.f32.gmra.mxu0 %v841
          %v957 = vpop.f32.mrf.mxu0
          %v958 = vadd.f32 0.0, %v957
          %959 = vmatmul.f32.gmra.mxu0 %v844
          %v960 = vpop.f32.mrf.mxu0
          %v961 = vadd.f32 0.0, %v960
          %962 = vmatmul.f32.gmra.mxu0 %v847
          %v963 = vpop.f32.mrf.mxu0
          %v964 = vadd.f32 0.0, %v963
          %965 = vdwg.mxu0
          %vm966 = vcmp.ge.f32.partialorder %v871, 0.0
          %vm967 = vcmp.ge.f32.partialorder %v874, 0.0
          %vm968 = vcmp.ge.f32.partialorder %v877, 0.0
          %vm969 = vcmp.ge.f32.partialorder %v880, 0.0
          %vm970 = vcmp.ge.f32.partialorder %v883, 0.0
          %vm971 = vcmp.ge.f32.partialorder %v886, 0.0
          %vm972 = vcmp.ge.f32.partialorder %v889, 0.0
          %vm973 = vcmp.ge.f32.partialorder %v892, 0.0
          %vm974 = vcmp.ge.f32.partialorder %v895, 0.0
          %vm975 = vcmp.ge.f32.partialorder %v898, 0.0
          %vm976 = vcmp.ge.f32.partialorder %v901, 0.0
          %vm977 = vcmp.ge.f32.partialorder %v904, 0.0
          %vm978 = vcmp.ge.f32.partialorder %v907, 0.0
          %vm979 = vcmp.ge.f32.partialorder %v910, 0.0
          %vm980 = vcmp.ge.f32.partialorder %v913, 0.0
          %vm981 = vcmp.ge.f32.partialorder %v916, 0.0
          %vm982 = vcmp.ge.f32.partialorder %v919, 0.0
          %vm983 = vcmp.ge.f32.partialorder %v922, 0.0
          %vm984 = vcmp.ge.f32.partialorder %v925, 0.0
          %vm985 = vcmp.ge.f32.partialorder %v928, 0.0
          %vm986 = vcmp.ge.f32.partialorder %v931, 0.0
          %vm987 = vcmp.ge.f32.partialorder %v934, 0.0
          %vm988 = vcmp.ge.f32.partialorder %v937, 0.0
          %vm989 = vcmp.ge.f32.partialorder %v940, 0.0
          %vm990 = vcmp.ge.f32.partialorder %v943, 0.0
          %vm991 = vcmp.ge.f32.partialorder %v946, 0.0
          %vm992 = vcmp.ge.f32.partialorder %v949, 0.0
          %vm993 = vcmp.ge.f32.partialorder %v952, 0.0
          %vm994 = vcmp.ge.f32.partialorder %v955, 0.0
          %vm995 = vcmp.ge.f32.partialorder %v958, 0.0
          %vm996 = vcmp.ge.f32.partialorder %v961, 0.0
          %vm997 = vcmp.ge.f32.partialorder %v964, 0.0
          %v998 = vmul.f32 %v871, 0.01
          %v999 = vmul.f32 %v874, 0.01
          %v1000 = vmul.f32 %v877, 0.01
          %v1001 = vmul.f32 %v880, 0.01
          %v1002 = vmul.f32 %v883, 0.01
          %v1003 = vmul.f32 %v886, 0.01
          %v1004 = vmul.f32 %v889, 0.01
          %v1005 = vmul.f32 %v892, 0.01
          %v1006 = vmul.f32 %v895, 0.01
          %v1007 = vmul.f32 %v898, 0.01
          %v1008 = vmul.f32 %v901, 0.01
          %v1009 = vmul.f32 %v904, 0.01
          %v1010 = vmul.f32 %v907, 0.01
          %v1011 = vmul.f32 %v910, 0.01
          %v1012 = vmul.f32 %v913, 0.01
          %v1013 = vmul.f32 %v916, 0.01
          %v1014 = vmul.f32 %v919, 0.01
          %v1015 = vmul.f32 %v922, 0.01
          %v1016 = vmul.f32 %v925, 0.01
          %v1017 = vmul.f32 %v928, 0.01
          %v1018 = vmul.f32 %v931, 0.01
          %v1019 = vmul.f32 %v934, 0.01
          %v1020 = vmul.f32 %v937, 0.01
          %v1021 = vmul.f32 %v940, 0.01
          %v1022 = vmul.f32 %v943, 0.01
          %v1023 = vmul.f32 %v946, 0.01
          %v1024 = vmul.f32 %v949, 0.01
          %v1025 = vmul.f32 %v952, 0.01
          %v1026 = vmul.f32 %v955, 0.01
          %v1027 = vmul.f32 %v958, 0.01
          %v1028 = vmul.f32 %v961, 0.01
          %v1029 = vmul.f32 %v964, 0.01
          %v1030 = vsel %vm966, %v871, %v998
          %v1031 = vsel %vm967, %v874, %v999
          %v1032 = vsel %vm968, %v877, %v1000
          %v1033 = vsel %vm969, %v880, %v1001
          %v1034 = vsel %vm970, %v883, %v1002
          %v1035 = vsel %vm971, %v886, %v1003
          %v1036 = vsel %vm972, %v889, %v1004
          %v1037 = vsel %vm973, %v892, %v1005
          %v1038 = vsel %vm974, %v895, %v1006
          %v1039 = vsel %vm975, %v898, %v1007
          %v1040 = vsel %vm976, %v901, %v1008
          %v1041 = vsel %vm977, %v904, %v1009
          %v1042 = vsel %vm978, %v907, %v1010
          %v1043 = vsel %vm979, %v910, %v1011
          %v1044 = vsel %vm980, %v913, %v1012
          %v1045 = vsel %vm981, %v916, %v1013
          %v1046 = vsel %vm982, %v919, %v1014
          %v1047 = vsel %vm983, %v922, %v1015
          %v1048 = vsel %vm984, %v925, %v1016
          %v1049 = vsel %vm985, %v928, %v1017
          %v1050 = vsel %vm986, %v931, %v1018
          %v1051 = vsel %vm987, %v934, %v1019
          %v1052 = vsel %vm988, %v937, %v1020
          %v1053 = vsel %vm989, %v940, %v1021
          %v1054 = vsel %vm990, %v943, %v1022
          %v1055 = vsel %vm991, %v946, %v1023
          %v1056 = vsel %vm992, %v949, %v1024
          %v1057 = vsel %vm993, %v952, %v1025
          %v1058 = vsel %vm994, %v955, %v1026
          %v1059 = vsel %vm995, %v958, %v1027
          %v1060 = vsel %vm996, %v961, %v1028
          %v1061 = vsel %vm997, %v964, %v1029
          %v1062 = vld [vmem:[%s3] sm:$0xf]
          %v1064 = vsel %vm752, %v1030, 0
          %v1067 = vsel %vm752, %v1031, 0
          %v1070 = vsel %vm752, %v1032, 0
          %v1073 = vsel %vm752, %v1033, 0
          %v1076 = vsel %vm752, %v1034, 0
          %v1079 = vsel %vm752, %v1035, 0
          %v1082 = vsel %vm752, %v1036, 0
          %v1085 = vsel %vm752, %v1037, 0
          %v1088 = vsel %vm752, %v1038, 0
          %v1091 = vsel %vm752, %v1039, 0
          %v1094 = vsel %vm752, %v1040, 0
          %v1097 = vsel %vm752, %v1041, 0
          %v1100 = vsel %vm752, %v1042, 0
          %v1103 = vsel %vm752, %v1043, 0
          %v1106 = vsel %vm752, %v1044, 0
          %v1109 = vsel %vm752, %v1045, 0
          %v1112 = vsel %vm752, %v1046, 0
          %v1115 = vsel %vm752, %v1047, 0
          %v1118 = vsel %vm752, %v1048, 0
          %v1121 = vsel %vm752, %v1049, 0
          %v1124 = vsel %vm752, %v1050, 0
          %v1127 = vsel %vm752, %v1051, 0
          %v1130 = vsel %vm752, %v1052, 0
          %v1133 = vsel %vm752, %v1053, 0
          %v1136 = vsel %vm752, %v1054, 0
          %v1139 = vsel %vm752, %v1055, 0
          %v1142 = vsel %vm752, %v1056, 0
          %v1145 = vsel %vm752, %v1057, 0
          %v1148 = vsel %vm752, %v1058, 0
          %v1151 = vsel %vm752, %v1059, 0
          %v1154 = vsel %vm752, %v1060, 0
          %v1157 = vsel %vm752, %v1061, 0
          %v1160 = vsel %vm849, %v1062, 0
          %1162 = vmatpush.msra.mxu0 0.0
          %1163 = vmatpush.msra.mxu0 0.0
          %1164 = vmatpush.msra.mxu0 0.0
          %1165 = vmatpush.msra.mxu0 0.0
          %1166 = vmatpush.msra.mxu0 0.0
          %1167 = vmatpush.msra.mxu0 0.0
          %1168 = vmatpush.msra.mxu0 0.0
          %1169 = vmatpush.msra.mxu0 0.0
          %1170 = vmatpush.msra.mxu0 0.0
          %1171 = vmatpush.msra.mxu0 0.0
          %1172 = vmatpush.msra.mxu0 0.0
          %1173 = vmatpush.msra.mxu0 0.0
          %1174 = vmatpush.msra.mxu0 0.0
          %1175 = vmatpush.msra.mxu0 0.0
          %1176 = vmatpush.msra.mxu0 0.0
          %1177 = vmatpush.msra.mxu0 %v1160
          %1178 = vmatmul.f32.gmra.mxu0 %v1064
          %v1179 = vpop.f32.mrf.mxu0
          %v1180 = vadd.f32 0.0, %v1179
          %1181 = vmatmul.f32.gmra.mxu0 %v1067
          %v1182 = vpop.f32.mrf.mxu0
          %v1183 = vadd.f32 0.0, %v1182
          %1184 = vmatmul.f32.gmra.mxu0 %v1070
          %v1185 = vpop.f32.mrf.mxu0
          %v1186 = vadd.f32 0.0, %v1185
          %1187 = vmatmul.f32.gmra.mxu0 %v1073
          %v1188 = vpop.f32.mrf.mxu0
          %v1189 = vadd.f32 0.0, %v1188
          %1190 = vmatmul.f32.gmra.mxu0 %v1076
          %v1191 = vpop.f32.mrf.mxu0
          %v1192 = vadd.f32 0.0, %v1191
          %1193 = vmatmul.f32.gmra.mxu0 %v1079
          %v1194 = vpop.f32.mrf.mxu0
          %v1195 = vadd.f32 0.0, %v1194
          %1196 = vmatmul.f32.gmra.mxu0 %v1082
          %v1197 = vpop.f32.mrf.mxu0
          %v1198 = vadd.f32 0.0, %v1197
          %1199 = vmatmul.f32.gmra.mxu0 %v1085
          %v1200 = vpop.f32.mrf.mxu0
          %v1201 = vadd.f32 0.0, %v1200
          %1202 = vmatmul.f32.gmra.mxu0 %v1088
          %v1203 = vpop.f32.mrf.mxu0
          %v1204 = vadd.f32 0.0, %v1203
          %1205 = vmatmul.f32.gmra.mxu0 %v1091
          %v1206 = vpop.f32.mrf.mxu0
          %v1207 = vadd.f32 0.0, %v1206
          %1208 = vmatmul.f32.gmra.mxu0 %v1094
          %v1209 = vpop.f32.mrf.mxu0
          %v1210 = vadd.f32 0.0, %v1209
          %1211 = vmatmul.f32.gmra.mxu0 %v1097
          %v1212 = vpop.f32.mrf.mxu0
          %v1213 = vadd.f32 0.0, %v1212
          %1214 = vmatmul.f32.gmra.mxu0 %v1100
          %v1215 = vpop.f32.mrf.mxu0
          %v1216 = vadd.f32 0.0, %v1215
          %1217 = vmatmul.f32.gmra.mxu0 %v1103
          %v1218 = vpop.f32.mrf.mxu0
          %v1219 = vadd.f32 0.0, %v1218
          %1220 = vmatmul.f32.gmra.mxu0 %v1106
          %v1221 = vpop.f32.mrf.mxu0
          %v1222 = vadd.f32 0.0, %v1221
          %1223 = vmatmul.f32.gmra.mxu0 %v1109
          %v1224 = vpop.f32.mrf.mxu0
          %v1225 = vadd.f32 0.0, %v1224
          %1226 = vmatmul.f32.gmra.mxu0 %v1112
          %v1227 = vpop.f32.mrf.mxu0
          %v1228 = vadd.f32 0.0, %v1227
          %1229 = vmatmul.f32.gmra.mxu0 %v1115
          %v1230 = vpop.f32.mrf.mxu0
          %v1231 = vadd.f32 0.0, %v1230
          %1232 = vmatmul.f32.gmra.mxu0 %v1118
          %v1233 = vpop.f32.mrf.mxu0
          %v1234 = vadd.f32 0.0, %v1233
          %1235 = vmatmul.f32.gmra.mxu0 %v1121
          %v1236 = vpop.f32.mrf.mxu0
          %v1237 = vadd.f32 0.0, %v1236
          %1238 = vmatmul.f32.gmra.mxu0 %v1124
          %v1239 = vpop.f32.mrf.mxu0
          %v1240 = vadd.f32 0.0, %v1239
          %1241 = vmatmul.f32.gmra.mxu0 %v1127
          %v1242 = vpop.f32.mrf.mxu0
          %v1243 = vadd.f32 0.0, %v1242
          %1244 = vmatmul.f32.gmra.mxu0 %v1130
          %v1245 = vpop.f32.mrf.mxu0
          %v1246 = vadd.f32 0.0, %v1245
          %1247 = vmatmul.f32.gmra.mxu0 %v1133
          %v1248 = vpop.f32.mrf.mxu0
          %v1249 = vadd.f32 0.0, %v1248
          %1250 = vmatmul.f32.gmra.mxu0 %v1136
          %v1251 = vpop.f32.mrf.mxu0
          %v1252 = vadd.f32 0.0, %v1251
          %1253 = vmatmul.f32.gmra.mxu0 %v1139
          %v1254 = vpop.f32.mrf.mxu0
          %v1255 = vadd.f32 0.0, %v1254
          %1256 = vmatmul.f32.gmra.mxu0 %v1142
          %v1257 = vpop.f32.mrf.mxu0
          %v1258 = vadd.f32 0.0, %v1257
          %1259 = vmatmul.f32.gmra.mxu0 %v1145
          %v1260 = vpop.f32.mrf.mxu0
          %v1261 = vadd.f32 0.0, %v1260
          %1262 = vmatmul.f32.gmra.mxu0 %v1148
          %v1263 = vpop.f32.mrf.mxu0
          %v1264 = vadd.f32 0.0, %v1263
          %1265 = vmatmul.f32.gmra.mxu0 %v1151
          %v1266 = vpop.f32.mrf.mxu0
          %v1267 = vadd.f32 0.0, %v1266
          %1268 = vmatmul.f32.gmra.mxu0 %v1154
          %v1269 = vpop.f32.mrf.mxu0
          %v1270 = vadd.f32 0.0, %v1269
          %1271 = vmatmul.f32.gmra.mxu0 %v1157
          %v1272 = vpop.f32.mrf.mxu0
          %v1273 = vadd.f32 0.0, %v1272
          %1274 = vdwg.mxu0
          %vm1275 = vcmp.ge.f32.partialorder %v1180, 0.0
          %vm1276 = vcmp.ge.f32.partialorder %v1183, 0.0
          %vm1277 = vcmp.ge.f32.partialorder %v1186, 0.0
          %vm1278 = vcmp.ge.f32.partialorder %v1189, 0.0
          %vm1279 = vcmp.ge.f32.partialorder %v1192, 0.0
          %vm1280 = vcmp.ge.f32.partialorder %v1195, 0.0
          %vm1281 = vcmp.ge.f32.partialorder %v1198, 0.0
          %vm1282 = vcmp.ge.f32.partialorder %v1201, 0.0
          %vm1283 = vcmp.ge.f32.partialorder %v1204, 0.0
          %vm1284 = vcmp.ge.f32.partialorder %v1207, 0.0
          %vm1285 = vcmp.ge.f32.partialorder %v1210, 0.0
          %vm1286 = vcmp.ge.f32.partialorder %v1213, 0.0
          %vm1287 = vcmp.ge.f32.partialorder %v1216, 0.0
          %vm1288 = vcmp.ge.f32.partialorder %v1219, 0.0
          %vm1289 = vcmp.ge.f32.partialorder %v1222, 0.0
          %vm1290 = vcmp.ge.f32.partialorder %v1225, 0.0
          %vm1291 = vcmp.ge.f32.partialorder %v1228, 0.0
          %vm1292 = vcmp.ge.f32.partialorder %v1231, 0.0
          %vm1293 = vcmp.ge.f32.partialorder %v1234, 0.0
          %vm1294 = vcmp.ge.f32.partialorder %v1237, 0.0
          %vm1295 = vcmp.ge.f32.partialorder %v1240, 0.0
          %vm1296 = vcmp.ge.f32.partialorder %v1243, 0.0
          %vm1297 = vcmp.ge.f32.partialorder %v1246, 0.0
          %vm1298 = vcmp.ge.f32.partialorder %v1249, 0.0
          %vm1299 = vcmp.ge.f32.partialorder %v1252, 0.0
          %vm1300 = vcmp.ge.f32.partialorder %v1255, 0.0
          %vm1301 = vcmp.ge.f32.partialorder %v1258, 0.0
          %vm1302 = vcmp.ge.f32.partialorder %v1261, 0.0
          %vm1303 = vcmp.ge.f32.partialorder %v1264, 0.0
          %vm1304 = vcmp.ge.f32.partialorder %v1267, 0.0
          %vm1305 = vcmp.ge.f32.partialorder %v1270, 0.0
          %vm1306 = vcmp.ge.f32.partialorder %v1273, 0.0
          %v1307 = vmul.f32 %v1180, 0.01
          %v1308 = vmul.f32 %v1183, 0.01
          %v1309 = vmul.f32 %v1186, 0.01
          %v1310 = vmul.f32 %v1189, 0.01
          %v1311 = vmul.f32 %v1192, 0.01
          %v1312 = vmul.f32 %v1195, 0.01
          %v1313 = vmul.f32 %v1198, 0.01
          %v1314 = vmul.f32 %v1201, 0.01
          %v1315 = vmul.f32 %v1204, 0.01
          %v1316 = vmul.f32 %v1207, 0.01
          %v1317 = vmul.f32 %v1210, 0.01
          %v1318 = vmul.f32 %v1213, 0.01
          %v1319 = vmul.f32 %v1216, 0.01
          %v1320 = vmul.f32 %v1219, 0.01
          %v1321 = vmul.f32 %v1222, 0.01
          %v1322 = vmul.f32 %v1225, 0.01
          %v1323 = vmul.f32 %v1228, 0.01
          %v1324 = vmul.f32 %v1231, 0.01
          %v1325 = vmul.f32 %v1234, 0.01
          %v1326 = vmul.f32 %v1237, 0.01
          %v1327 = vmul.f32 %v1240, 0.01
          %v1328 = vmul.f32 %v1243, 0.01
          %v1329 = vmul.f32 %v1246, 0.01
          %v1330 = vmul.f32 %v1249, 0.01
          %v1331 = vmul.f32 %v1252, 0.01
          %v1332 = vmul.f32 %v1255, 0.01
          %v1333 = vmul.f32 %v1258, 0.01
          %v1334 = vmul.f32 %v1261, 0.01
          %v1335 = vmul.f32 %v1264, 0.01
          %v1336 = vmul.f32 %v1267, 0.01
          %v1337 = vmul.f32 %v1270, 0.01
          %v1338 = vmul.f32 %v1273, 0.01
          %v1339 = vsel %vm1275, %v1180, %v1307
          %v1340 = vsel %vm1276, %v1183, %v1308
          %v1341 = vsel %vm1277, %v1186, %v1309
          %v1342 = vsel %vm1278, %v1189, %v1310
          %v1343 = vsel %vm1279, %v1192, %v1311
          %v1344 = vsel %vm1280, %v1195, %v1312
          %v1345 = vsel %vm1281, %v1198, %v1313
          %v1346 = vsel %vm1282, %v1201, %v1314
          %v1347 = vsel %vm1283, %v1204, %v1315
          %v1348 = vsel %vm1284, %v1207, %v1316
          %v1349 = vsel %vm1285, %v1210, %v1317
          %v1350 = vsel %vm1286, %v1213, %v1318
          %v1351 = vsel %vm1287, %v1216, %v1319
          %v1352 = vsel %vm1288, %v1219, %v1320
          %v1353 = vsel %vm1289, %v1222, %v1321
          %v1354 = vsel %vm1290, %v1225, %v1322
          %v1355 = vsel %vm1291, %v1228, %v1323
          %v1356 = vsel %vm1292, %v1231, %v1324
          %v1357 = vsel %vm1293, %v1234, %v1325
          %v1358 = vsel %vm1294, %v1237, %v1326
          %v1359 = vsel %vm1295, %v1240, %v1327
          %v1360 = vsel %vm1296, %v1243, %v1328
          %v1361 = vsel %vm1297, %v1246, %v1329
          %v1362 = vsel %vm1298, %v1249, %v1330
          %v1363 = vsel %vm1299, %v1252, %v1331
          %v1364 = vsel %vm1300, %v1255, %v1332
          %v1365 = vsel %vm1301, %v1258, %v1333
          %v1366 = vsel %vm1302, %v1261, %v1334
          %v1367 = vsel %vm1303, %v1264, %v1335
          %v1368 = vsel %vm1304, %v1267, %v1336
          %v1369 = vsel %vm1305, %v1270, %v1337
          %v1370 = vsel %vm1306, %v1273, %v1338
          %v1371 = vld [vmem:[%s4] sm:$0xff]
          %vm1372 = vcmask 64512
          %v1374 = vsel %vm1372, %v1339, 0
          %v1377 = vsel %vm1372, %v1340, 0
          %v1380 = vsel %vm1372, %v1341, 0
          %v1383 = vsel %vm1372, %v1342, 0
          %v1386 = vsel %vm1372, %v1343, 0
          %v1389 = vsel %vm1372, %v1344, 0
          %v1392 = vsel %vm1372, %v1345, 0
          %v1395 = vsel %vm1372, %v1346, 0
          %v1398 = vsel %vm1372, %v1347, 0
          %v1401 = vsel %vm1372, %v1348, 0
          %v1404 = vsel %vm1372, %v1349, 0
          %v1407 = vsel %vm1372, %v1350, 0
          %v1410 = vsel %vm1372, %v1351, 0
          %v1413 = vsel %vm1372, %v1352, 0
          %v1416 = vsel %vm1372, %v1353, 0
          %v1419 = vsel %vm1372, %v1354, 0
          %v1422 = vsel %vm1372, %v1355, 0
          %v1425 = vsel %vm1372, %v1356, 0
          %v1428 = vsel %vm1372, %v1357, 0
          %v1431 = vsel %vm1372, %v1358, 0
          %v1434 = vsel %vm1372, %v1359, 0
          %v1437 = vsel %vm1372, %v1360, 0
          %v1440 = vsel %vm1372, %v1361, 0
          %v1443 = vsel %vm1372, %v1362, 0
          %v1446 = vsel %vm1372, %v1363, 0
          %v1449 = vsel %vm1372, %v1364, 0
          %v1452 = vsel %vm1372, %v1365, 0
          %v1455 = vsel %vm1372, %v1366, 0
          %v1458 = vsel %vm1372, %v1367, 0
          %v1461 = vsel %vm1372, %v1368, 0
          %v1464 = vsel %vm1372, %v1369, 0
          %v1467 = vsel %vm1372, %v1370, 0
          %1469 = vmatpush.msra.mxu0 0.0
          %1470 = vmatpush.msra.mxu0 0.0
          %1471 = vmatpush.msra.mxu0 0.0
          %1472 = vmatpush.msra.mxu0 0.0
          %1473 = vmatpush.msra.mxu0 0.0
          %1474 = vmatpush.msra.mxu0 0.0
          %1475 = vmatpush.msra.mxu0 0.0
          %1476 = vmatpush.msra.mxu0 0.0
          %1477 = vmatpush.msra.mxu0 0.0
          %1478 = vmatpush.msra.mxu0 0.0
          %1479 = vmatpush.msra.mxu0 0.0
          %1480 = vmatpush.msra.mxu0 0.0
          %1481 = vmatpush.msra.mxu0 0.0
          %1482 = vmatpush.msra.mxu0 0.0
          %1483 = vmatpush.msra.mxu0 0.0
          %1484 = vmatpush.msra.mxu0 %v1371
          %1485 = vmatmul.f32.gmra.mxu0 %v1374
          %v1486 = vpop.f32.mrf.mxu0
          %v1487 = vadd.f32 0.0, %v1486
          %1488 = vmatmul.f32.gmra.mxu0 %v1377
          %v1489 = vpop.f32.mrf.mxu0
          %v1490 = vadd.f32 0.0, %v1489
          %1491 = vmatmul.f32.gmra.mxu0 %v1380
          %v1492 = vpop.f32.mrf.mxu0
          %v1493 = vadd.f32 0.0, %v1492
          %1494 = vmatmul.f32.gmra.mxu0 %v1383
          %v1495 = vpop.f32.mrf.mxu0
          %v1496 = vadd.f32 0.0, %v1495
          %1497 = vmatmul.f32.gmra.mxu0 %v1386
          %v1498 = vpop.f32.mrf.mxu0
          %v1499 = vadd.f32 0.0, %v1498
          %1500 = vmatmul.f32.gmra.mxu0 %v1389
          %v1501 = vpop.f32.mrf.mxu0
          %v1502 = vadd.f32 0.0, %v1501
          %1503 = vmatmul.f32.gmra.mxu0 %v1392
          %v1504 = vpop.f32.mrf.mxu0
          %v1505 = vadd.f32 0.0, %v1504
          %1506 = vmatmul.f32.gmra.mxu0 %v1395
          %v1507 = vpop.f32.mrf.mxu0
          %v1508 = vadd.f32 0.0, %v1507
          %1509 = vmatmul.f32.gmra.mxu0 %v1398
          %v1510 = vpop.f32.mrf.mxu0
          %v1511 = vadd.f32 0.0, %v1510
          %1512 = vmatmul.f32.gmra.mxu0 %v1401
          %v1513 = vpop.f32.mrf.mxu0
          %v1514 = vadd.f32 0.0, %v1513
          %1515 = vmatmul.f32.gmra.mxu0 %v1404
          %v1516 = vpop.f32.mrf.mxu0
          %v1517 = vadd.f32 0.0, %v1516
          %1518 = vmatmul.f32.gmra.mxu0 %v1407
          %v1519 = vpop.f32.mrf.mxu0
          %v1520 = vadd.f32 0.0, %v1519
          %1521 = vmatmul.f32.gmra.mxu0 %v1410
          %v1522 = vpop.f32.mrf.mxu0
          %v1523 = vadd.f32 0.0, %v1522
          %1524 = vmatmul.f32.gmra.mxu0 %v1413
          %v1525 = vpop.f32.mrf.mxu0
          %v1526 = vadd.f32 0.0, %v1525
          %1527 = vmatmul.f32.gmra.mxu0 %v1416
          %v1528 = vpop.f32.mrf.mxu0
          %v1529 = vadd.f32 0.0, %v1528
          %1530 = vmatmul.f32.gmra.mxu0 %v1419
          %v1531 = vpop.f32.mrf.mxu0
          %v1532 = vadd.f32 0.0, %v1531
          %1533 = vmatmul.f32.gmra.mxu0 %v1422
          %v1534 = vpop.f32.mrf.mxu0
          %v1535 = vadd.f32 0.0, %v1534
          %1536 = vmatmul.f32.gmra.mxu0 %v1425
          %v1537 = vpop.f32.mrf.mxu0
          %v1538 = vadd.f32 0.0, %v1537
          %1539 = vmatmul.f32.gmra.mxu0 %v1428
          %v1540 = vpop.f32.mrf.mxu0
          %v1541 = vadd.f32 0.0, %v1540
          %1542 = vmatmul.f32.gmra.mxu0 %v1431
          %v1543 = vpop.f32.mrf.mxu0
          %v1544 = vadd.f32 0.0, %v1543
          %1545 = vmatmul.f32.gmra.mxu0 %v1434
          %v1546 = vpop.f32.mrf.mxu0
          %v1547 = vadd.f32 0.0, %v1546
          %1548 = vmatmul.f32.gmra.mxu0 %v1437
          %v1549 = vpop.f32.mrf.mxu0
          %v1550 = vadd.f32 0.0, %v1549
          %1551 = vmatmul.f32.gmra.mxu0 %v1440
          %v1552 = vpop.f32.mrf.mxu0
          %v1553 = vadd.f32 0.0, %v1552
          %1554 = vmatmul.f32.gmra.mxu0 %v1443
          %v1555 = vpop.f32.mrf.mxu0
          %v1556 = vadd.f32 0.0, %v1555
          %1557 = vmatmul.f32.gmra.mxu0 %v1446
          %v1558 = vpop.f32.mrf.mxu0
          %v1559 = vadd.f32 0.0, %v1558
          %1560 = vmatmul.f32.gmra.mxu0 %v1449
          %v1561 = vpop.f32.mrf.mxu0
          %v1562 = vadd.f32 0.0, %v1561
          %1563 = vmatmul.f32.gmra.mxu0 %v1452
          %v1564 = vpop.f32.mrf.mxu0
          %v1565 = vadd.f32 0.0, %v1564
          %1566 = vmatmul.f32.gmra.mxu0 %v1455
          %v1567 = vpop.f32.mrf.mxu0
          %v1568 = vadd.f32 0.0, %v1567
          %1569 = vmatmul.f32.gmra.mxu0 %v1458
          %v1570 = vpop.f32.mrf.mxu0
          %v1571 = vadd.f32 0.0, %v1570
          %1572 = vmatmul.f32.gmra.mxu0 %v1461
          %v1573 = vpop.f32.mrf.mxu0
          %v1574 = vadd.f32 0.0, %v1573
          %1575 = vmatmul.f32.gmra.mxu0 %v1464
          %v1576 = vpop.f32.mrf.mxu0
          %v1577 = vadd.f32 0.0, %v1576
          %1578 = vmatmul.f32.gmra.mxu0 %v1467
          %v1579 = vpop.f32.mrf.mxu0
          %v1580 = vadd.f32 0.0, %v1579
          %1581 = vdwg.mxu0
          %vm1582 = vcmp.ge.f32.partialorder %v1487, 0.0
          %vm1583 = vcmp.ge.f32.partialorder %v1490, 0.0
          %vm1584 = vcmp.ge.f32.partialorder %v1493, 0.0
          %vm1585 = vcmp.ge.f32.partialorder %v1496, 0.0
          %vm1586 = vcmp.ge.f32.partialorder %v1499, 0.0
          %vm1587 = vcmp.ge.f32.partialorder %v1502, 0.0
          %vm1588 = vcmp.ge.f32.partialorder %v1505, 0.0
          %vm1589 = vcmp.ge.f32.partialorder %v1508, 0.0
          %vm1590 = vcmp.ge.f32.partialorder %v1511, 0.0
          %vm1591 = vcmp.ge.f32.partialorder %v1514, 0.0
          %vm1592 = vcmp.ge.f32.partialorder %v1517, 0.0
          %vm1593 = vcmp.ge.f32.partialorder %v1520, 0.0
          %vm1594 = vcmp.ge.f32.partialorder %v1523, 0.0
          %vm1595 = vcmp.ge.f32.partialorder %v1526, 0.0
          %vm1596 = vcmp.ge.f32.partialorder %v1529, 0.0
          %vm1597 = vcmp.ge.f32.partialorder %v1532, 0.0
          %vm1598 = vcmp.ge.f32.partialorder %v1535, 0.0
          %vm1599 = vcmp.ge.f32.partialorder %v1538, 0.0
          %vm1600 = vcmp.ge.f32.partialorder %v1541, 0.0
          %vm1601 = vcmp.ge.f32.partialorder %v1544, 0.0
          %vm1602 = vcmp.ge.f32.partialorder %v1547, 0.0
          %vm1603 = vcmp.ge.f32.partialorder %v1550, 0.0
          %vm1604 = vcmp.ge.f32.partialorder %v1553, 0.0
          %vm1605 = vcmp.ge.f32.partialorder %v1556, 0.0
          %vm1606 = vcmp.ge.f32.partialorder %v1559, 0.0
          %vm1607 = vcmp.ge.f32.partialorder %v1562, 0.0
          %vm1608 = vcmp.ge.f32.partialorder %v1565, 0.0
          %vm1609 = vcmp.ge.f32.partialorder %v1568, 0.0
          %vm1610 = vcmp.ge.f32.partialorder %v1571, 0.0
          %vm1611 = vcmp.ge.f32.partialorder %v1574, 0.0
          %vm1612 = vcmp.ge.f32.partialorder %v1577, 0.0
          %vm1613 = vcmp.ge.f32.partialorder %v1580, 0.0
          %v1614 = vmul.f32 %v1487, 0.01
          %v1615 = vmul.f32 %v1490, 0.01
          %v1616 = vmul.f32 %v1493, 0.01
          %v1617 = vmul.f32 %v1496, 0.01
          %v1618 = vmul.f32 %v1499, 0.01
          %v1619 = vmul.f32 %v1502, 0.01
          %v1620 = vmul.f32 %v1505, 0.01
          %v1621 = vmul.f32 %v1508, 0.01
          %v1622 = vmul.f32 %v1511, 0.01
          %v1623 = vmul.f32 %v1514, 0.01
          %v1624 = vmul.f32 %v1517, 0.01
          %v1625 = vmul.f32 %v1520, 0.01
          %v1626 = vmul.f32 %v1523, 0.01
          %v1627 = vmul.f32 %v1526, 0.01
          %v1628 = vmul.f32 %v1529, 0.01
          %v1629 = vmul.f32 %v1532, 0.01
          %v1630 = vmul.f32 %v1535, 0.01
          %v1631 = vmul.f32 %v1538, 0.01
          %v1632 = vmul.f32 %v1541, 0.01
          %v1633 = vmul.f32 %v1544, 0.01
          %v1634 = vmul.f32 %v1547, 0.01
          %v1635 = vmul.f32 %v1550, 0.01
          %v1636 = vmul.f32 %v1553, 0.01
          %v1637 = vmul.f32 %v1556, 0.01
          %v1638 = vmul.f32 %v1559, 0.01
          %v1639 = vmul.f32 %v1562, 0.01
          %v1640 = vmul.f32 %v1565, 0.01
          %v1641 = vmul.f32 %v1568, 0.01
          %v1642 = vmul.f32 %v1571, 0.01
          %v1643 = vmul.f32 %v1574, 0.01
          %v1644 = vmul.f32 %v1577, 0.01
          %v1645 = vmul.f32 %v1580, 0.01
          %v1646 = vsel %vm1582, %v1487, %v1614
          %v1647 = vsel %vm1583, %v1490, %v1615
          %v1648 = vsel %vm1584, %v1493, %v1616
          %v1649 = vsel %vm1585, %v1496, %v1617
          %v1650 = vsel %vm1586, %v1499, %v1618
          %v1651 = vsel %vm1587, %v1502, %v1619
          %v1652 = vsel %vm1588, %v1505, %v1620
          %v1653 = vsel %vm1589, %v1508, %v1621
          %v1654 = vsel %vm1590, %v1511, %v1622
          %v1655 = vsel %vm1591, %v1514, %v1623
          %v1656 = vsel %vm1592, %v1517, %v1624
          %v1657 = vsel %vm1593, %v1520, %v1625
          %v1658 = vsel %vm1594, %v1523, %v1626
          %v1659 = vsel %vm1595, %v1526, %v1627
          %v1660 = vsel %vm1596, %v1529, %v1628
          %v1661 = vsel %vm1597, %v1532, %v1629
          %v1662 = vsel %vm1598, %v1535, %v1630
          %v1663 = vsel %vm1599, %v1538, %v1631
          %v1664 = vsel %vm1600, %v1541, %v1632
          %v1665 = vsel %vm1601, %v1544, %v1633
          %v1666 = vsel %vm1602, %v1547, %v1634
          %v1667 = vsel %vm1603, %v1550, %v1635
          %v1668 = vsel %vm1604, %v1553, %v1636
          %v1669 = vsel %vm1605, %v1556, %v1637
          %v1670 = vsel %vm1606, %v1559, %v1638
          %v1671 = vsel %vm1607, %v1562, %v1639
          %v1672 = vsel %vm1608, %v1565, %v1640
          %v1673 = vsel %vm1609, %v1568, %v1641
          %v1674 = vsel %vm1610, %v1571, %v1642
          %v1675 = vsel %vm1611, %v1574, %v1643
          %v1676 = vsel %vm1612, %v1577, %v1644
          %v1677 = vsel %vm1613, %v1580, %v1645
          %v1678 = vld [vmem:[%s5] sm:$0xff]
          %v1679 = vld [vmem:[%s5 + $0x8] sm:$0xff]
          %vm1680 = vcmask 130048
          %v1682 = vsel %vm1680, %v1646, 0
          %v1685 = vsel %vm1680, %v1647, 0
          %v1688 = vsel %vm1680, %v1648, 0
          %v1691 = vsel %vm1680, %v1649, 0
          %v1694 = vsel %vm1680, %v1650, 0
          %v1697 = vsel %vm1680, %v1651, 0
          %v1700 = vsel %vm1680, %v1652, 0
          %v1703 = vsel %vm1680, %v1653, 0
          %v1706 = vsel %vm1680, %v1654, 0
          %v1709 = vsel %vm1680, %v1655, 0
          %v1712 = vsel %vm1680, %v1656, 0
          %v1715 = vsel %vm1680, %v1657, 0
          %v1718 = vsel %vm1680, %v1658, 0
          %v1721 = vsel %vm1680, %v1659, 0
          %v1724 = vsel %vm1680, %v1660, 0
          %v1727 = vsel %vm1680, %v1661, 0
          %v1730 = vsel %vm1680, %v1662, 0
          %v1733 = vsel %vm1680, %v1663, 0
          %v1736 = vsel %vm1680, %v1664, 0
          %v1739 = vsel %vm1680, %v1665, 0
          %v1742 = vsel %vm1680, %v1666, 0
          %v1745 = vsel %vm1680, %v1667, 0
          %v1748 = vsel %vm1680, %v1668, 0
          %v1751 = vsel %vm1680, %v1669, 0
          %v1754 = vsel %vm1680, %v1670, 0
          %v1757 = vsel %vm1680, %v1671, 0
          %v1760 = vsel %vm1680, %v1672, 0
          %v1763 = vsel %vm1680, %v1673, 0
          %v1766 = vsel %vm1680, %v1674, 0
          %v1769 = vsel %vm1680, %v1675, 0
          %v1772 = vsel %vm1680, %v1676, 0
          %v1775 = vsel %vm1680, %v1677, 0
          %1777 = vmatpush.msra.mxu0 0.0
          %1778 = vmatpush.msra.mxu0 0.0
          %1779 = vmatpush.msra.mxu0 0.0
          %1780 = vmatpush.msra.mxu0 0.0
          %1781 = vmatpush.msra.mxu0 0.0
          %1782 = vmatpush.msra.mxu0 0.0
          %1783 = vmatpush.msra.mxu0 0.0
          %1784 = vmatpush.msra.mxu0 0.0
          %1785 = vmatpush.msra.mxu0 0.0
          %1786 = vmatpush.msra.mxu0 0.0
          %1787 = vmatpush.msra.mxu0 0.0
          %1788 = vmatpush.msra.mxu0 0.0
          %1789 = vmatpush.msra.mxu0 0.0
          %1790 = vmatpush.msra.mxu0 0.0
          %1791 = vmatpush.msra.mxu0 %v1679
          %1792 = vmatpush.msra.mxu0 %v1678
          %1793 = vmatmul.f32.gmra.mxu0 %v1682
          %v1794 = vpop.f32.mrf.mxu0
          %v1795 = vadd.f32 0.0, %v1794
          %1796 = vmatmul.f32.gmra.mxu0 %v1685
          %v1797 = vpop.f32.mrf.mxu0
          %v1798 = vadd.f32 0.0, %v1797
          %1799 = vmatmul.f32.gmra.mxu0 %v1688
          %v1800 = vpop.f32.mrf.mxu0
          %v1801 = vadd.f32 0.0, %v1800
          %1802 = vmatmul.f32.gmra.mxu0 %v1691
          %v1803 = vpop.f32.mrf.mxu0
          %v1804 = vadd.f32 0.0, %v1803
          %1805 = vmatmul.f32.gmra.mxu0 %v1694
          %v1806 = vpop.f32.mrf.mxu0
          %v1807 = vadd.f32 0.0, %v1806
          %1808 = vmatmul.f32.gmra.mxu0 %v1697
          %v1809 = vpop.f32.mrf.mxu0
          %v1810 = vadd.f32 0.0, %v1809
          %1811 = vmatmul.f32.gmra.mxu0 %v1700
          %v1812 = vpop.f32.mrf.mxu0
          %v1813 = vadd.f32 0.0, %v1812
          %1814 = vmatmul.f32.gmra.mxu0 %v1703
          %v1815 = vpop.f32.mrf.mxu0
          %v1816 = vadd.f32 0.0, %v1815
          %1817 = vmatmul.f32.gmra.mxu0 %v1706
          %v1818 = vpop.f32.mrf.mxu0
          %v1819 = vadd.f32 0.0, %v1818
          %1820 = vmatmul.f32.gmra.mxu0 %v1709
          %v1821 = vpop.f32.mrf.mxu0
          %v1822 = vadd.f32 0.0, %v1821
          %1823 = vmatmul.f32.gmra.mxu0 %v1712
          %v1824 = vpop.f32.mrf.mxu0
          %v1825 = vadd.f32 0.0, %v1824
          %1826 = vmatmul.f32.gmra.mxu0 %v1715
          %v1827 = vpop.f32.mrf.mxu0
          %v1828 = vadd.f32 0.0, %v1827
          %1829 = vmatmul.f32.gmra.mxu0 %v1718
          %v1830 = vpop.f32.mrf.mxu0
          %v1831 = vadd.f32 0.0, %v1830
          %1832 = vmatmul.f32.gmra.mxu0 %v1721
          %v1833 = vpop.f32.mrf.mxu0
          %v1834 = vadd.f32 0.0, %v1833
          %1835 = vmatmul.f32.gmra.mxu0 %v1724
          %v1836 = vpop.f32.mrf.mxu0
          %v1837 = vadd.f32 0.0, %v1836
          %1838 = vmatmul.f32.gmra.mxu0 %v1727
          %v1839 = vpop.f32.mrf.mxu0
          %v1840 = vadd.f32 0.0, %v1839
          %1841 = vmatmul.f32.gmra.mxu0 %v1730
          %v1842 = vpop.f32.mrf.mxu0
          %v1843 = vadd.f32 0.0, %v1842
          %1844 = vmatmul.f32.gmra.mxu0 %v1733
          %v1845 = vpop.f32.mrf.mxu0
          %v1846 = vadd.f32 0.0, %v1845
          %1847 = vmatmul.f32.gmra.mxu0 %v1736
          %v1848 = vpop.f32.mrf.mxu0
          %v1849 = vadd.f32 0.0, %v1848
          %1850 = vmatmul.f32.gmra.mxu0 %v1739
          %v1851 = vpop.f32.mrf.mxu0
          %v1852 = vadd.f32 0.0, %v1851
          %1853 = vmatmul.f32.gmra.mxu0 %v1742
          %v1854 = vpop.f32.mrf.mxu0
          %v1855 = vadd.f32 0.0, %v1854
          %1856 = vmatmul.f32.gmra.mxu0 %v1745
          %v1857 = vpop.f32.mrf.mxu0
          %v1858 = vadd.f32 0.0, %v1857
          %1859 = vmatmul.f32.gmra.mxu0 %v1748
          %v1860 = vpop.f32.mrf.mxu0
          %v1861 = vadd.f32 0.0, %v1860
          %1862 = vmatmul.f32.gmra.mxu0 %v1751
          %v1863 = vpop.f32.mrf.mxu0
          %v1864 = vadd.f32 0.0, %v1863
          %1865 = vmatmul.f32.gmra.mxu0 %v1754
          %v1866 = vpop.f32.mrf.mxu0
          %v1867 = vadd.f32 0.0, %v1866
          %1868 = vmatmul.f32.gmra.mxu0 %v1757
          %v1869 = vpop.f32.mrf.mxu0
          %v1870 = vadd.f32 0.0, %v1869
          %1871 = vmatmul.f32.gmra.mxu0 %v1760
          %v1872 = vpop.f32.mrf.mxu0
          %v1873 = vadd.f32 0.0, %v1872
          %1874 = vmatmul.f32.gmra.mxu0 %v1763
          %v1875 = vpop.f32.mrf.mxu0
          %v1876 = vadd.f32 0.0, %v1875
          %1877 = vmatmul.f32.gmra.mxu0 %v1766
          %v1878 = vpop.f32.mrf.mxu0
          %v1879 = vadd.f32 0.0, %v1878
          %1880 = vmatmul.f32.gmra.mxu0 %v1769
          %v1881 = vpop.f32.mrf.mxu0
          %v1882 = vadd.f32 0.0, %v1881
          %1883 = vmatmul.f32.gmra.mxu0 %v1772
          %v1884 = vpop.f32.mrf.mxu0
          %v1885 = vadd.f32 0.0, %v1884
          %1886 = vmatmul.f32.gmra.mxu0 %v1775
          %v1887 = vpop.f32.mrf.mxu0
          %v1888 = vadd.f32 0.0, %v1887
          %1889 = vdwg.mxu0
          %vm1890 = vcmp.ge.f32.partialorder %v1795, 0.0
          %vm1891 = vcmp.ge.f32.partialorder %v1798, 0.0
          %vm1892 = vcmp.ge.f32.partialorder %v1801, 0.0
          %vm1893 = vcmp.ge.f32.partialorder %v1804, 0.0
          %vm1894 = vcmp.ge.f32.partialorder %v1807, 0.0
          %vm1895 = vcmp.ge.f32.partialorder %v1810, 0.0
          %vm1896 = vcmp.ge.f32.partialorder %v1813, 0.0
          %vm1897 = vcmp.ge.f32.partialorder %v1816, 0.0
          %vm1898 = vcmp.ge.f32.partialorder %v1819, 0.0
          %vm1899 = vcmp.ge.f32.partialorder %v1822, 0.0
          %vm1900 = vcmp.ge.f32.partialorder %v1825, 0.0
          %vm1901 = vcmp.ge.f32.partialorder %v1828, 0.0
          %vm1902 = vcmp.ge.f32.partialorder %v1831, 0.0
          %vm1903 = vcmp.ge.f32.partialorder %v1834, 0.0
          %vm1904 = vcmp.ge.f32.partialorder %v1837, 0.0
          %vm1905 = vcmp.ge.f32.partialorder %v1840, 0.0
          %vm1906 = vcmp.ge.f32.partialorder %v1843, 0.0
          %vm1907 = vcmp.ge.f32.partialorder %v1846, 0.0
          %vm1908 = vcmp.ge.f32.partialorder %v1849, 0.0
          %vm1909 = vcmp.ge.f32.partialorder %v1852, 0.0
          %vm1910 = vcmp.ge.f32.partialorder %v1855, 0.0
          %vm1911 = vcmp.ge.f32.partialorder %v1858, 0.0
          %vm1912 = vcmp.ge.f32.partialorder %v1861, 0.0
          %vm1913 = vcmp.ge.f32.partialorder %v1864, 0.0
          %vm1914 = vcmp.ge.f32.partialorder %v1867, 0.0
          %vm1915 = vcmp.ge.f32.partialorder %v1870, 0.0
          %vm1916 = vcmp.ge.f32.partialorder %v1873, 0.0
          %vm1917 = vcmp.ge.f32.partialorder %v1876, 0.0
          %vm1918 = vcmp.ge.f32.partialorder %v1879, 0.0
          %vm1919 = vcmp.ge.f32.partialorder %v1882, 0.0
          %vm1920 = vcmp.ge.f32.partialorder %v1885, 0.0
          %vm1921 = vcmp.ge.f32.partialorder %v1888, 0.0
          %v1922 = vmul.f32 %v1795, 0.01
          %v1923 = vmul.f32 %v1798, 0.01
          %v1924 = vmul.f32 %v1801, 0.01
          %v1925 = vmul.f32 %v1804, 0.01
          %v1926 = vmul.f32 %v1807, 0.01
          %v1927 = vmul.f32 %v1810, 0.01
          %v1928 = vmul.f32 %v1813, 0.01
          %v1929 = vmul.f32 %v1816, 0.01
          %v1930 = vmul.f32 %v1819, 0.01
          %v1931 = vmul.f32 %v1822, 0.01
          %v1932 = vmul.f32 %v1825, 0.01
          %v1933 = vmul.f32 %v1828, 0.01
          %v1934 = vmul.f32 %v1831, 0.01
          %v1935 = vmul.f32 %v1834, 0.01
          %v1936 = vmul.f32 %v1837, 0.01
          %v1937 = vmul.f32 %v1840, 0.01
          %v1938 = vmul.f32 %v1843, 0.01
          %v1939 = vmul.f32 %v1846, 0.01
          %v1940 = vmul.f32 %v1849, 0.01
          %v1941 = vmul.f32 %v1852, 0.01
          %v1942 = vmul.f32 %v1855, 0.01
          %v1943 = vmul.f32 %v1858, 0.01
          %v1944 = vmul.f32 %v1861, 0.01
          %v1945 = vmul.f32 %v1864, 0.01
          %v1946 = vmul.f32 %v1867, 0.01
          %v1947 = vmul.f32 %v1870, 0.01
          %v1948 = vmul.f32 %v1873, 0.01
          %v1949 = vmul.f32 %v1876, 0.01
          %v1950 = vmul.f32 %v1879, 0.01
          %v1951 = vmul.f32 %v1882, 0.01
          %v1952 = vmul.f32 %v1885, 0.01
          %v1953 = vmul.f32 %v1888, 0.01
          %v1954 = vsel %vm1890, %v1795, %v1922
          %v1955 = vsel %vm1891, %v1798, %v1923
          %v1956 = vsel %vm1892, %v1801, %v1924
          %v1957 = vsel %vm1893, %v1804, %v1925
          %v1958 = vsel %vm1894, %v1807, %v1926
          %v1959 = vsel %vm1895, %v1810, %v1927
          %v1960 = vsel %vm1896, %v1813, %v1928
          %v1961 = vsel %vm1897, %v1816, %v1929
          %v1962 = vsel %vm1898, %v1819, %v1930
          %v1963 = vsel %vm1899, %v1822, %v1931
          %v1964 = vsel %vm1900, %v1825, %v1932
          %v1965 = vsel %vm1901, %v1828, %v1933
          %v1966 = vsel %vm1902, %v1831, %v1934
          %v1967 = vsel %vm1903, %v1834, %v1935
          %v1968 = vsel %vm1904, %v1837, %v1936
          %v1969 = vsel %vm1905, %v1840, %v1937
          %v1970 = vsel %vm1906, %v1843, %v1938
          %v1971 = vsel %vm1907, %v1846, %v1939
          %v1972 = vsel %vm1908, %v1849, %v1940
          %v1973 = vsel %vm1909, %v1852, %v1941
          %v1974 = vsel %vm1910, %v1855, %v1942
          %v1975 = vsel %vm1911, %v1858, %v1943
          %v1976 = vsel %vm1912, %v1861, %v1944
          %v1977 = vsel %vm1913, %v1864, %v1945
          %v1978 = vsel %vm1914, %v1867, %v1946
          %v1979 = vsel %vm1915, %v1870, %v1947
          %v1980 = vsel %vm1916, %v1873, %v1948
          %v1981 = vsel %vm1917, %v1876, %v1949
          %v1982 = vsel %vm1918, %v1879, %v1950
          %v1983 = vsel %vm1919, %v1882, %v1951
          %v1984 = vsel %vm1920, %v1885, %v1952
          %v1985 = vsel %vm1921, %v1888, %v1953
          %v1986 = vld [vmem:[%s6] sm:$0xff]
          %v1987 = vld [vmem:[%s6 + $0x8] sm:$0xff]
          %v1988 = vld [vmem:[%s6 + $0x10] sm:$0xff]
          %v1989 = vld [vmem:[%s6 + $0x18] sm:$0xff]
          %vm1990 = vcmask 261120
          %v1992 = vsel %vm1990, %v1954, 0
          %v1995 = vsel %vm1990, %v1955, 0
          %v1998 = vsel %vm1990, %v1956, 0
          %v2001 = vsel %vm1990, %v1957, 0
          %v2004 = vsel %vm1990, %v1958, 0
          %v2007 = vsel %vm1990, %v1959, 0
          %v2010 = vsel %vm1990, %v1960, 0
          %v2013 = vsel %vm1990, %v1961, 0
          %v2016 = vsel %vm1990, %v1962, 0
          %v2019 = vsel %vm1990, %v1963, 0
          %v2022 = vsel %vm1990, %v1964, 0
          %v2025 = vsel %vm1990, %v1965, 0
          %v2028 = vsel %vm1990, %v1966, 0
          %v2031 = vsel %vm1990, %v1967, 0
          %v2034 = vsel %vm1990, %v1968, 0
          %v2037 = vsel %vm1990, %v1969, 0
          %v2040 = vsel %vm1990, %v1970, 0
          %v2043 = vsel %vm1990, %v1971, 0
          %v2046 = vsel %vm1990, %v1972, 0
          %v2049 = vsel %vm1990, %v1973, 0
          %v2052 = vsel %vm1990, %v1974, 0
          %v2055 = vsel %vm1990, %v1975, 0
          %v2058 = vsel %vm1990, %v1976, 0
          %v2061 = vsel %vm1990, %v1977, 0
          %v2064 = vsel %vm1990, %v1978, 0
          %v2067 = vsel %vm1990, %v1979, 0
          %v2070 = vsel %vm1990, %v1980, 0
          %v2073 = vsel %vm1990, %v1981, 0
          %v2076 = vsel %vm1990, %v1982, 0
          %v2079 = vsel %vm1990, %v1983, 0
          %v2082 = vsel %vm1990, %v1984, 0
          %v2085 = vsel %vm1990, %v1985, 0
          %2087 = vmatpush.msra.mxu0 0.0
          %2088 = vmatpush.msra.mxu0 0.0
          %2089 = vmatpush.msra.mxu0 0.0
          %2090 = vmatpush.msra.mxu0 0.0
          %2091 = vmatpush.msra.mxu0 0.0
          %2092 = vmatpush.msra.mxu0 0.0
          %2093 = vmatpush.msra.mxu0 0.0
          %2094 = vmatpush.msra.mxu0 0.0
          %2095 = vmatpush.msra.mxu0 0.0
          %2096 = vmatpush.msra.mxu0 0.0
          %2097 = vmatpush.msra.mxu0 0.0
          %2098 = vmatpush.msra.mxu0 0.0
          %2099 = vmatpush.msra.mxu0 %v1989
          %2100 = vmatpush.msra.mxu0 %v1988
          %2101 = vmatpush.msra.mxu0 %v1987
          %2102 = vmatpush.msra.mxu0 %v1986
          %2103 = vmatmul.f32.gmra.mxu0 %v1992
          %v2104 = vpop.f32.mrf.mxu0
          %v2105 = vadd.f32 0.0, %v2104
          %2106 = vmatmul.f32.gmra.mxu0 %v1995
          %v2107 = vpop.f32.mrf.mxu0
          %v2108 = vadd.f32 0.0, %v2107
          %2109 = vmatmul.f32.gmra.mxu0 %v1998
          %v2110 = vpop.f32.mrf.mxu0
          %v2111 = vadd.f32 0.0, %v2110
          %2112 = vmatmul.f32.gmra.mxu0 %v2001
          %v2113 = vpop.f32.mrf.mxu0
          %v2114 = vadd.f32 0.0, %v2113
          %2115 = vmatmul.f32.gmra.mxu0 %v2004
          %v2116 = vpop.f32.mrf.mxu0
          %v2117 = vadd.f32 0.0, %v2116
          %2118 = vmatmul.f32.gmra.mxu0 %v2007
          %v2119 = vpop.f32.mrf.mxu0
          %v2120 = vadd.f32 0.0, %v2119
          %2121 = vmatmul.f32.gmra.mxu0 %v2010
          %v2122 = vpop.f32.mrf.mxu0
          %v2123 = vadd.f32 0.0, %v2122
          %2124 = vmatmul.f32.gmra.mxu0 %v2013
          %v2125 = vpop.f32.mrf.mxu0
          %v2126 = vadd.f32 0.0, %v2125
          %2127 = vmatmul.f32.gmra.mxu0 %v2016
          %v2128 = vpop.f32.mrf.mxu0
          %v2129 = vadd.f32 0.0, %v2128
          %2130 = vmatmul.f32.gmra.mxu0 %v2019
          %v2131 = vpop.f32.mrf.mxu0
          %v2132 = vadd.f32 0.0, %v2131
          %2133 = vmatmul.f32.gmra.mxu0 %v2022
          %v2134 = vpop.f32.mrf.mxu0
          %v2135 = vadd.f32 0.0, %v2134
          %2136 = vmatmul.f32.gmra.mxu0 %v2025
          %v2137 = vpop.f32.mrf.mxu0
          %v2138 = vadd.f32 0.0, %v2137
          %2139 = vmatmul.f32.gmra.mxu0 %v2028
          %v2140 = vpop.f32.mrf.mxu0
          %v2141 = vadd.f32 0.0, %v2140
          %2142 = vmatmul.f32.gmra.mxu0 %v2031
          %v2143 = vpop.f32.mrf.mxu0
          %v2144 = vadd.f32 0.0, %v2143
          %2145 = vmatmul.f32.gmra.mxu0 %v2034
          %v2146 = vpop.f32.mrf.mxu0
          %v2147 = vadd.f32 0.0, %v2146
          %2148 = vmatmul.f32.gmra.mxu0 %v2037
          %v2149 = vpop.f32.mrf.mxu0
          %v2150 = vadd.f32 0.0, %v2149
          %2151 = vmatmul.f32.gmra.mxu0 %v2040
          %v2152 = vpop.f32.mrf.mxu0
          %v2153 = vadd.f32 0.0, %v2152
          %2154 = vmatmul.f32.gmra.mxu0 %v2043
          %v2155 = vpop.f32.mrf.mxu0
          %v2156 = vadd.f32 0.0, %v2155
          %2157 = vmatmul.f32.gmra.mxu0 %v2046
          %v2158 = vpop.f32.mrf.mxu0
          %v2159 = vadd.f32 0.0, %v2158
          %2160 = vmatmul.f32.gmra.mxu0 %v2049
          %v2161 = vpop.f32.mrf.mxu0
          %v2162 = vadd.f32 0.0, %v2161
          %2163 = vmatmul.f32.gmra.mxu0 %v2052
          %v2164 = vpop.f32.mrf.mxu0
          %v2165 = vadd.f32 0.0, %v2164
          %2166 = vmatmul.f32.gmra.mxu0 %v2055
          %v2167 = vpop.f32.mrf.mxu0
          %v2168 = vadd.f32 0.0, %v2167
          %2169 = vmatmul.f32.gmra.mxu0 %v2058
          %v2170 = vpop.f32.mrf.mxu0
          %v2171 = vadd.f32 0.0, %v2170
          %2172 = vmatmul.f32.gmra.mxu0 %v2061
          %v2173 = vpop.f32.mrf.mxu0
          %v2174 = vadd.f32 0.0, %v2173
          %2175 = vmatmul.f32.gmra.mxu0 %v2064
          %v2176 = vpop.f32.mrf.mxu0
          %v2177 = vadd.f32 0.0, %v2176
          %2178 = vmatmul.f32.gmra.mxu0 %v2067
          %v2179 = vpop.f32.mrf.mxu0
          %v2180 = vadd.f32 0.0, %v2179
          %2181 = vmatmul.f32.gmra.mxu0 %v2070
          %v2182 = vpop.f32.mrf.mxu0
          %v2183 = vadd.f32 0.0, %v2182
          %2184 = vmatmul.f32.gmra.mxu0 %v2073
          %v2185 = vpop.f32.mrf.mxu0
          %v2186 = vadd.f32 0.0, %v2185
          %2187 = vmatmul.f32.gmra.mxu0 %v2076
          %v2188 = vpop.f32.mrf.mxu0
          %v2189 = vadd.f32 0.0, %v2188
          %2190 = vmatmul.f32.gmra.mxu0 %v2079
          %v2191 = vpop.f32.mrf.mxu0
          %v2192 = vadd.f32 0.0, %v2191
          %2193 = vmatmul.f32.gmra.mxu0 %v2082
          %v2194 = vpop.f32.mrf.mxu0
          %v2195 = vadd.f32 0.0, %v2194
          %2196 = vmatmul.f32.gmra.mxu0 %v2085
          %v2197 = vpop.f32.mrf.mxu0
          %v2198 = vadd.f32 0.0, %v2197
          %2199 = vdwg.mxu0
          %vm2200 = vcmp.ge.f32.partialorder %v2105, 0.0
          %vm2201 = vcmp.ge.f32.partialorder %v2108, 0.0
          %vm2202 = vcmp.ge.f32.partialorder %v2111, 0.0
          %vm2203 = vcmp.ge.f32.partialorder %v2114, 0.0
          %vm2204 = vcmp.ge.f32.partialorder %v2117, 0.0
          %vm2205 = vcmp.ge.f32.partialorder %v2120, 0.0
          %vm2206 = vcmp.ge.f32.partialorder %v2123, 0.0
          %vm2207 = vcmp.ge.f32.partialorder %v2126, 0.0
          %vm2208 = vcmp.ge.f32.partialorder %v2129, 0.0
          %vm2209 = vcmp.ge.f32.partialorder %v2132, 0.0
          %vm2210 = vcmp.ge.f32.partialorder %v2135, 0.0
          %vm2211 = vcmp.ge.f32.partialorder %v2138, 0.0
          %vm2212 = vcmp.ge.f32.partialorder %v2141, 0.0
          %vm2213 = vcmp.ge.f32.partialorder %v2144, 0.0
          %vm2214 = vcmp.ge.f32.partialorder %v2147, 0.0
          %vm2215 = vcmp.ge.f32.partialorder %v2150, 0.0
          %vm2216 = vcmp.ge.f32.partialorder %v2153, 0.0
          %vm2217 = vcmp.ge.f32.partialorder %v2156, 0.0
          %vm2218 = vcmp.ge.f32.partialorder %v2159, 0.0
          %vm2219 = vcmp.ge.f32.partialorder %v2162, 0.0
          %vm2220 = vcmp.ge.f32.partialorder %v2165, 0.0
          %vm2221 = vcmp.ge.f32.partialorder %v2168, 0.0
          %vm2222 = vcmp.ge.f32.partialorder %v2171, 0.0
          %vm2223 = vcmp.ge.f32.partialorder %v2174, 0.0
          %vm2224 = vcmp.ge.f32.partialorder %v2177, 0.0
          %vm2225 = vcmp.ge.f32.partialorder %v2180, 0.0
          %vm2226 = vcmp.ge.f32.partialorder %v2183, 0.0
          %vm2227 = vcmp.ge.f32.partialorder %v2186, 0.0
          %vm2228 = vcmp.ge.f32.partialorder %v2189, 0.0
          %vm2229 = vcmp.ge.f32.partialorder %v2192, 0.0
          %vm2230 = vcmp.ge.f32.partialorder %v2195, 0.0
          %vm2231 = vcmp.ge.f32.partialorder %v2198, 0.0
          %v2232 = vmul.f32 %v2105, 0.01
          %v2233 = vmul.f32 %v2108, 0.01
          %v2234 = vmul.f32 %v2111, 0.01
          %v2235 = vmul.f32 %v2114, 0.01
          %v2236 = vmul.f32 %v2117, 0.01
          %v2237 = vmul.f32 %v2120, 0.01
          %v2238 = vmul.f32 %v2123, 0.01
          %v2239 = vmul.f32 %v2126, 0.01
          %v2240 = vmul.f32 %v2129, 0.01
          %v2241 = vmul.f32 %v2132, 0.01
          %v2242 = vmul.f32 %v2135, 0.01
          %v2243 = vmul.f32 %v2138, 0.01
          %v2244 = vmul.f32 %v2141, 0.01
          %v2245 = vmul.f32 %v2144, 0.01
          %v2246 = vmul.f32 %v2147, 0.01
          %v2247 = vmul.f32 %v2150, 0.01
          %v2248 = vmul.f32 %v2153, 0.01
          %v2249 = vmul.f32 %v2156, 0.01
          %v2250 = vmul.f32 %v2159, 0.01
          %v2251 = vmul.f32 %v2162, 0.01
          %v2252 = vmul.f32 %v2165, 0.01
          %v2253 = vmul.f32 %v2168, 0.01
          %v2254 = vmul.f32 %v2171, 0.01
          %v2255 = vmul.f32 %v2174, 0.01
          %v2256 = vmul.f32 %v2177, 0.01
          %v2257 = vmul.f32 %v2180, 0.01
          %v2258 = vmul.f32 %v2183, 0.01
          %v2259 = vmul.f32 %v2186, 0.01
          %v2260 = vmul.f32 %v2189, 0.01
          %v2261 = vmul.f32 %v2192, 0.01
          %v2262 = vmul.f32 %v2195, 0.01
          %v2263 = vmul.f32 %v2198, 0.01
          %v2264 = vsel %vm2200, %v2105, %v2232
          %v2265 = vsel %vm2201, %v2108, %v2233
          %v2266 = vsel %vm2202, %v2111, %v2234
          %v2267 = vsel %vm2203, %v2114, %v2235
          %v2268 = vsel %vm2204, %v2117, %v2236
          %v2269 = vsel %vm2205, %v2120, %v2237
          %v2270 = vsel %vm2206, %v2123, %v2238
          %v2271 = vsel %vm2207, %v2126, %v2239
          %v2272 = vsel %vm2208, %v2129, %v2240
          %v2273 = vsel %vm2209, %v2132, %v2241
          %v2274 = vsel %vm2210, %v2135, %v2242
          %v2275 = vsel %vm2211, %v2138, %v2243
          %v2276 = vsel %vm2212, %v2141, %v2244
          %v2277 = vsel %vm2213, %v2144, %v2245
          %v2278 = vsel %vm2214, %v2147, %v2246
          %v2279 = vsel %vm2215, %v2150, %v2247
          %v2280 = vsel %vm2216, %v2153, %v2248
          %v2281 = vsel %vm2217, %v2156, %v2249
          %v2282 = vsel %vm2218, %v2159, %v2250
          %v2283 = vsel %vm2219, %v2162, %v2251
          %v2284 = vsel %vm2220, %v2165, %v2252
          %v2285 = vsel %vm2221, %v2168, %v2253
          %v2286 = vsel %vm2222, %v2171, %v2254
          %v2287 = vsel %vm2223, %v2174, %v2255
          %v2288 = vsel %vm2224, %v2177, %v2256
          %v2289 = vsel %vm2225, %v2180, %v2257
          %v2290 = vsel %vm2226, %v2183, %v2258
          %v2291 = vsel %vm2227, %v2186, %v2259
          %v2292 = vsel %vm2228, %v2189, %v2260
          %v2293 = vsel %vm2229, %v2192, %v2261
          %v2294 = vsel %vm2230, %v2195, %v2262
          %v2295 = vsel %vm2231, %v2198, %v2263
          %vm2296 = vcmask 523264
          %2297 = vst.msk [vmem:[#allocation2] sm:$0xff] %vm2296, %v2264
          %2298 = vst.msk [vmem:[#allocation2 + $0x8] sm:$0xff] %vm2296, %v2265
          %2299 = vst.msk [vmem:[#allocation2 + $0x10] sm:$0xff] %vm2296, %v2266
          %2300 = vst.msk [vmem:[#allocation2 + $0x18] sm:$0xff] %vm2296, %v2267
          %2301 = vst.msk [vmem:[#allocation2 + $0x20] sm:$0xff] %vm2296, %v2268
          %2302 = vst.msk [vmem:[#allocation2 + $0x28] sm:$0xff] %vm2296, %v2269
          %2303 = vst.msk [vmem:[#allocation2 + $0x30] sm:$0xff] %vm2296, %v2270
          %2304 = vst.msk [vmem:[#allocation2 + $0x38] sm:$0xff] %vm2296, %v2271
          %2305 = vst.msk [vmem:[#allocation2 + $0x40] sm:$0xff] %vm2296, %v2272
          %2306 = vst.msk [vmem:[#allocation2 + $0x48] sm:$0xff] %vm2296, %v2273
          %2307 = vst.msk [vmem:[#allocation2 + $0x50] sm:$0xff] %vm2296, %v2274
          %2308 = vst.msk [vmem:[#allocation2 + $0x58] sm:$0xff] %vm2296, %v2275
          %2309 = vst.msk [vmem:[#allocation2 + $0x60] sm:$0xff] %vm2296, %v2276
          %2310 = vst.msk [vmem:[#allocation2 + $0x68] sm:$0xff] %vm2296, %v2277
          %2311 = vst.msk [vmem:[#allocation2 + $0x70] sm:$0xff] %vm2296, %v2278
          %2312 = vst.msk [vmem:[#allocation2 + $0x78] sm:$0xff] %vm2296, %v2279
          %2313 = vst.msk [vmem:[#allocation2 + $0x80] sm:$0xff] %vm2296, %v2280
          %2314 = vst.msk [vmem:[#allocation2 + $0x88] sm:$0xff] %vm2296, %v2281
          %2315 = vst.msk [vmem:[#allocation2 + $0x90] sm:$0xff] %vm2296, %v2282
          %2316 = vst.msk [vmem:[#allocation2 + $0x98] sm:$0xff] %vm2296, %v2283
          %2317 = vst.msk [vmem:[#allocation2 + $0xa0] sm:$0xff] %vm2296, %v2284
          %2318 = vst.msk [vmem:[#allocation2 + $0xa8] sm:$0xff] %vm2296, %v2285
          %2319 = vst.msk [vmem:[#allocation2 + $0xb0] sm:$0xff] %vm2296, %v2286
          %2320 = vst.msk [vmem:[#allocation2 + $0xb8] sm:$0xff] %vm2296, %v2287
          %2321 = vst.msk [vmem:[#allocation2 + $0xc0] sm:$0xff] %vm2296, %v2288
          %2322 = vst.msk [vmem:[#allocation2 + $0xc8] sm:$0xff] %vm2296, %v2289
          %2323 = vst.msk [vmem:[#allocation2 + $0xd0] sm:$0xff] %vm2296, %v2290
          %2324 = vst.msk [vmem:[#allocation2 + $0xd8] sm:$0xff] %vm2296, %v2291
          %2325 = vst.msk [vmem:[#allocation2 + $0xe0] sm:$0xff] %vm2296, %v2292
          %2326 = vst.msk [vmem:[#allocation2 + $0xe8] sm:$0xff] %vm2296, %v2293
          %2327 = vst.msk [vmem:[#allocation2 + $0xf0] sm:$0xff] %vm2296, %v2294
          %2328 = vst.msk [vmem:[#allocation2 + $0xf8] sm:$0xff] %vm2296, %v2295
        $region94: #{tpu_custom_call.1} parent=85 // pred_fallthru
          _
        %v2329 = vld [vmem:[#allocation2] sm:$0xff]
        %v2330 = vld [vmem:[#allocation2 + $0x8] sm:$0xff]
        %v2331 = vld [vmem:[#allocation2 + $0x10] sm:$0xff]
        %v2332 = vld [vmem:[#allocation2 + $0x18] sm:$0xff]
        %v2333 = vld [vmem:[#allocation2 + $0x20] sm:$0xff]
        %v2334 = vld [vmem:[#allocation2 + $0x28] sm:$0xff]
        %v2335 = vld [vmem:[#allocation2 + $0x30] sm:$0xff]
        %v2336 = vld [vmem:[#allocation2 + $0x38] sm:$0xff]
        %v2337 = vld [vmem:[#allocation2 + $0x40] sm:$0xff]
        %v2338 = vld [vmem:[#allocation2 + $0x48] sm:$0xff]
        %v2339 = vld [vmem:[#allocation2 + $0x50] sm:$0xff]
        %v2340 = vld [vmem:[#allocation2 + $0x58] sm:$0xff]
        %v2341 = vld [vmem:[#allocation2 + $0x60] sm:$0xff]
        %v2342 = vld [vmem:[#allocation2 + $0x68] sm:$0xff]
        %v2343 = vld [vmem:[#allocation2 + $0x70] sm:$0xff]
        %v2344 = vld [vmem:[#allocation2 + $0x78] sm:$0xff]
        %v2345 = vld [vmem:[#allocation2 + $0x80] sm:$0xff]
        %v2346 = vld [vmem:[#allocation2 + $0x88] sm:$0xff]
        %v2347 = vld [vmem:[#allocation2 + $0x90] sm:$0xff]
        %v2348 = vld [vmem:[#allocation2 + $0x98] sm:$0xff]
        %v2349 = vld [vmem:[#allocation2 + $0xa0] sm:$0xff]
        %v2350 = vld [vmem:[#allocation2 + $0xa8] sm:$0xff]
        %v2351 = vld [vmem:[#allocation2 + $0xb0] sm:$0xff]
        %v2352 = vld [vmem:[#allocation2 + $0xb8] sm:$0xff]
        %v2353 = vld [vmem:[#allocation2 + $0xc0] sm:$0xff]
        %v2354 = vld [vmem:[#allocation2 + $0xc8] sm:$0xff]
        %v2355 = vld [vmem:[#allocation2 + $0xd0] sm:$0xff]
        %v2356 = vld [vmem:[#allocation2 + $0xd8] sm:$0xff]
        %v2357 = vld [vmem:[#allocation2 + $0xe0] sm:$0xff]
        %v2358 = vld [vmem:[#allocation2 + $0xe8] sm:$0xff]
        %v2359 = vld [vmem:[#allocation2 + $0xf0] sm:$0xff]
        %v2360 = vld [vmem:[#allocation2 + $0xf8] sm:$0xff]
        %v2361 = vld [vmem:[%s361] sm:$0xff]
        %v2362 = vld [vmem:[%s361 + $0x8] sm:$0xff]
        %v2363 = vld [vmem:[%s361 + $0x10] sm:$0xff]
        %v2364 = vld [vmem:[%s361 + $0x18] sm:$0xff]
        %v2365 = vld [vmem:[%s361 + $0x20] sm:$0xff]
        %v2366 = vld [vmem:[%s361 + $0x28] sm:$0xff]
        %v2367 = vld [vmem:[%s361 + $0x30] sm:$0xff]
        %v2368 = vld [vmem:[%s361 + $0x38] sm:$0xff]
        %vm2369 = vcmask 523264
        %v2371 = vsel %vm2369, %v2329, 0
        %v2374 = vsel %vm2369, %v2330, 0
        %v2377 = vsel %vm2369, %v2331, 0
        %v2380 = vsel %vm2369, %v2332, 0
        %v2383 = vsel %vm2369, %v2333, 0
        %v2386 = vsel %vm2369, %v2334, 0
        %v2389 = vsel %vm2369, %v2335, 0
        %v2392 = vsel %vm2369, %v2336, 0
        %v2395 = vsel %vm2369, %v2337, 0
        %v2398 = vsel %vm2369, %v2338, 0
        %v2401 = vsel %vm2369, %v2339, 0
        %v2404 = vsel %vm2369, %v2340, 0
        %v2407 = vsel %vm2369, %v2341, 0
        %v2410 = vsel %vm2369, %v2342, 0
        %v2413 = vsel %vm2369, %v2343, 0
        %v2416 = vsel %vm2369, %v2344, 0
        %v2419 = vsel %vm2369, %v2345, 0
        %v2422 = vsel %vm2369, %v2346, 0
        %v2425 = vsel %vm2369, %v2347, 0
        %v2428 = vsel %vm2369, %v2348, 0
        %v2431 = vsel %vm2369, %v2349, 0
        %v2434 = vsel %vm2369, %v2350, 0
        %v2437 = vsel %vm2369, %v2351, 0
        %v2440 = vsel %vm2369, %v2352, 0
        %v2443 = vsel %vm2369, %v2353, 0
        %v2446 = vsel %vm2369, %v2354, 0
        %v2449 = vsel %vm2369, %v2355, 0
        %v2452 = vsel %vm2369, %v2356, 0
        %v2455 = vsel %vm2369, %v2357, 0
        %v2458 = vsel %vm2369, %v2358, 0
        %v2461 = vsel %vm2369, %v2359, 0
        %v2464 = vsel %vm2369, %v2360, 0
        %2466 = vmatpush.msra.mxu0 0.0
        %2467 = vmatpush.msra.mxu0 0.0
        %2468 = vmatpush.msra.mxu0 0.0
        %2469 = vmatpush.msra.mxu0 0.0
        %2470 = vmatpush.msra.mxu0 0.0
        %2471 = vmatpush.msra.mxu0 0.0
        %2472 = vmatpush.msra.mxu0 0.0
        %2473 = vmatpush.msra.mxu0 0.0
        %2474 = vmatpush.msra.mxu0 %v2368
        %2475 = vmatpush.msra.mxu0 %v2367
        %2476 = vmatpush.msra.mxu0 %v2366
        %2477 = vmatpush.msra.mxu0 %v2365
        %2478 = vmatpush.msra.mxu0 %v2364
        %2479 = vmatpush.msra.mxu0 %v2363
        %2480 = vmatpush.msra.mxu0 %v2362
        %2481 = vmatpush.msra.mxu0 %v2361
        %2482 = vmatmul.f32.gmra.mxu0 %v2371
        %v2483 = vpop.f32.mrf.mxu0
        %v2484 = vadd.f32 0.0, %v2483
        %2485 = vmatmul.f32.gmra.mxu0 %v2374
        %v2486 = vpop.f32.mrf.mxu0
        %v2487 = vadd.f32 0.0, %v2486
        %2488 = vmatmul.f32.gmra.mxu0 %v2377
        %v2489 = vpop.f32.mrf.mxu0
        %v2490 = vadd.f32 0.0, %v2489
        %2491 = vmatmul.f32.gmra.mxu0 %v2380
        %v2492 = vpop.f32.mrf.mxu0
        %v2493 = vadd.f32 0.0, %v2492
        %2494 = vmatmul.f32.gmra.mxu0 %v2383
        %v2495 = vpop.f32.mrf.mxu0
        %v2496 = vadd.f32 0.0, %v2495
        %2497 = vmatmul.f32.gmra.mxu0 %v2386
        %v2498 = vpop.f32.mrf.mxu0
        %v2499 = vadd.f32 0.0, %v2498
        %2500 = vmatmul.f32.gmra.mxu0 %v2389
        %v2501 = vpop.f32.mrf.mxu0
        %v2502 = vadd.f32 0.0, %v2501
        %2503 = vmatmul.f32.gmra.mxu0 %v2392
        %v2504 = vpop.f32.mrf.mxu0
        %v2505 = vadd.f32 0.0, %v2504
        %2506 = vmatmul.f32.gmra.mxu0 %v2395
        %v2507 = vpop.f32.mrf.mxu0
        %v2508 = vadd.f32 0.0, %v2507
        %2509 = vmatmul.f32.gmra.mxu0 %v2398
        %v2510 = vpop.f32.mrf.mxu0
        %v2511 = vadd.f32 0.0, %v2510
        %2512 = vmatmul.f32.gmra.mxu0 %v2401
        %v2513 = vpop.f32.mrf.mxu0
        %v2514 = vadd.f32 0.0, %v2513
        %2515 = vmatmul.f32.gmra.mxu0 %v2404
        %v2516 = vpop.f32.mrf.mxu0
        %v2517 = vadd.f32 0.0, %v2516
        %2518 = vmatmul.f32.gmra.mxu0 %v2407
        %v2519 = vpop.f32.mrf.mxu0
        %v2520 = vadd.f32 0.0, %v2519
        %2521 = vmatmul.f32.gmra.mxu0 %v2410
        %v2522 = vpop.f32.mrf.mxu0
        %v2523 = vadd.f32 0.0, %v2522
        %2524 = vmatmul.f32.gmra.mxu0 %v2413
        %v2525 = vpop.f32.mrf.mxu0
        %v2526 = vadd.f32 0.0, %v2525
        %2527 = vmatmul.f32.gmra.mxu0 %v2416
        %v2528 = vpop.f32.mrf.mxu0
        %v2529 = vadd.f32 0.0, %v2528
        %2530 = vmatmul.f32.gmra.mxu0 %v2419
        %v2531 = vpop.f32.mrf.mxu0
        %v2532 = vadd.f32 0.0, %v2531
        %2533 = vmatmul.f32.gmra.mxu0 %v2422
        %v2534 = vpop.f32.mrf.mxu0
        %v2535 = vadd.f32 0.0, %v2534
        %2536 = vmatmul.f32.gmra.mxu0 %v2425
        %v2537 = vpop.f32.mrf.mxu0
        %v2538 = vadd.f32 0.0, %v2537
        %2539 = vmatmul.f32.gmra.mxu0 %v2428
        %v2540 = vpop.f32.mrf.mxu0
        %v2541 = vadd.f32 0.0, %v2540
        %2542 = vmatmul.f32.gmra.mxu0 %v2431
        %v2543 = vpop.f32.mrf.mxu0
        %v2544 = vadd.f32 0.0, %v2543
        %2545 = vmatmul.f32.gmra.mxu0 %v2434
        %v2546 = vpop.f32.mrf.mxu0
        %v2547 = vadd.f32 0.0, %v2546
        %2548 = vmatmul.f32.gmra.mxu0 %v2437
        %v2549 = vpop.f32.mrf.mxu0
        %v2550 = vadd.f32 0.0, %v2549
        %2551 = vmatmul.f32.gmra.mxu0 %v2440
        %v2552 = vpop.f32.mrf.mxu0
        %v2553 = vadd.f32 0.0, %v2552
        %2554 = vmatmul.f32.gmra.mxu0 %v2443
        %v2555 = vpop.f32.mrf.mxu0
        %v2556 = vadd.f32 0.0, %v2555
        %2557 = vmatmul.f32.gmra.mxu0 %v2446
        %v2558 = vpop.f32.mrf.mxu0
        %v2559 = vadd.f32 0.0, %v2558
        %2560 = vmatmul.f32.gmra.mxu0 %v2449
        %v2561 = vpop.f32.mrf.mxu0
        %v2562 = vadd.f32 0.0, %v2561
        %2563 = vmatmul.f32.gmra.mxu0 %v2452
        %v2564 = vpop.f32.mrf.mxu0
        %v2565 = vadd.f32 0.0, %v2564
        %2566 = vmatmul.f32.gmra.mxu0 %v2455
        %v2567 = vpop.f32.mrf.mxu0
        %v2568 = vadd.f32 0.0, %v2567
        %2569 = vmatmul.f32.gmra.mxu0 %v2458
        %v2570 = vpop.f32.mrf.mxu0
        %v2571 = vadd.f32 0.0, %v2570
        %2572 = vmatmul.f32.gmra.mxu0 %v2461
        %v2573 = vpop.f32.mrf.mxu0
        %v2574 = vadd.f32 0.0, %v2573
        %2575 = vmatmul.f32.gmra.mxu0 %v2464
        %v2576 = vpop.f32.mrf.mxu0
        %v2577 = vadd.f32 0.0, %v2576
        %2578 = vdwg.mxu0
        %2579 = vst [vmem:[%s396] sm:$0xff] %v2484
        %2580 = vst [vmem:[%s396 + $0x8] sm:$0xff] %v2487
        %2581 = vst [vmem:[%s396 + $0x10] sm:$0xff] %v2490
        %2582 = vst [vmem:[%s396 + $0x18] sm:$0xff] %v2493
        %2583 = vst [vmem:[%s396 + $0x20] sm:$0xff] %v2496
        %2584 = vst [vmem:[%s396 + $0x28] sm:$0xff] %v2499
        %2585 = vst [vmem:[%s396 + $0x30] sm:$0xff] %v2502
        %2586 = vst [vmem:[%s396 + $0x38] sm:$0xff] %v2505
        %2587 = vst [vmem:[%s396 + $0x40] sm:$0xff] %v2508
        %2588 = vst [vmem:[%s396 + $0x48] sm:$0xff] %v2511
        %2589 = vst [vmem:[%s396 + $0x50] sm:$0xff] %v2514
        %2590 = vst [vmem:[%s396 + $0x58] sm:$0xff] %v2517
        %2591 = vst [vmem:[%s396 + $0x60] sm:$0xff] %v2520
        %2592 = vst [vmem:[%s396 + $0x68] sm:$0xff] %v2523
        %2593 = vst [vmem:[%s396 + $0x70] sm:$0xff] %v2526
        %2594 = vst [vmem:[%s396 + $0x78] sm:$0xff] %v2529
        %2595 = vst [vmem:[%s396 + $0x80] sm:$0xff] %v2532
        %2596 = vst [vmem:[%s396 + $0x88] sm:$0xff] %v2535
        %2597 = vst [vmem:[%s396 + $0x90] sm:$0xff] %v2538
        %2598 = vst [vmem:[%s396 + $0x98] sm:$0xff] %v2541
        %2599 = vst [vmem:[%s396 + $0xa0] sm:$0xff] %v2544
        %2600 = vst [vmem:[%s396 + $0xa8] sm:$0xff] %v2547
        %2601 = vst [vmem:[%s396 + $0xb0] sm:$0xff] %v2550
        %2602 = vst [vmem:[%s396 + $0xb8] sm:$0xff] %v2553
        %2603 = vst [vmem:[%s396 + $0xc0] sm:$0xff] %v2556
        %2604 = vst [vmem:[%s396 + $0xc8] sm:$0xff] %v2559
        %2605 = vst [vmem:[%s396 + $0xd0] sm:$0xff] %v2562
        %2606 = vst [vmem:[%s396 + $0xd8] sm:$0xff] %v2565
        %2607 = vst [vmem:[%s396 + $0xe0] sm:$0xff] %v2568
        %2608 = vst [vmem:[%s396 + $0xe8] sm:$0xff] %v2571
        %2609 = vst [vmem:[%s396 + $0xf0] sm:$0xff] %v2574
        %2610 = vst [vmem:[%s396 + $0xf8] sm:$0xff] %v2577
        %s2611 = sand.u32 %s222, 1
        %s2612 = scalar_lea.sflag [#allocation5], %s2611
        %s2613 = sand.u32 %s222, 1
        %s2614 = smul.addr %s2613, 256
        %s2615 = scalar_lea.vmem [#allocation4], %s2614
        // Predicated region
        $region95: #{tpu_custom_call.1} parent=85 // pred_check
          %p2616 = pneg %p232
        $region96: #{tpu_custom_call.1} parent=85 // pred_check_branch
          %2618 = sbr.rel (%p2616) target = $region98
        $region97: #{tpu_custom_call.1} parent=85 // pred_region
          %s2619 = smul.u32 32, %s26
          %2621 = vsyncadd %s2612, 0
          %s2622 = smul.addr %s2619, 2
          %s2623 = sadd.s32 %s27, %s2622
          %s2624 = smul.addr %s2623, 8
          %s2625 = scalar_lea.hbm %s8, %s2624
          %s2626 = sshll.u32 %s2615, 4
          %s2627 = int_to_ptr.vmem [resolvable:$true] %s2626
          %s2628 = sshll.u32 %s2625, 4
          %s2629 = int_to_ptr.hbm [resolvable:$true] %s2628
          %2634 = dma.vmem_to_hbm [thread:$0]  %s2627, 4096, %s2629, %s2612, 128, 256, 8
        $region98: #{tpu_custom_call.1} parent=85 // pred_fallthru
          _
      $region86: #{tpu_custom_call.1} parent=5 // pred_fallthru
        _
      %p2635 = scmp.le.s32.totalorder 2, %s17
      // Predicated region
      $region99: #{tpu_custom_call.1} parent=5 // pred_check
        %p2636 = pneg %p2635
      $region100: #{tpu_custom_call.1} parent=5 // pred_check_branch
        %2638 = sbr.rel (%p2636) target = $region102
      $region101: #{tpu_custom_call.1} parent=5 // pred_region
        %s2639 = ssub.s32 %s17, 2
        // Predicated region
        $region103: #{tpu_custom_call.1} parent=101 // pred_check
          %p2640 = pneg %p238
        $region104: #{tpu_custom_call.1} parent=101 // pred_check_branch
          %2642 = sbr.rel (%p2640) target = $region106
        $region105: #{tpu_custom_call.1} parent=101 // pred_region
          %s2643 = sand.u32 %s223, 1
          %s2644 = scalar_lea.sflag [#allocation5], %s2643
          %s2645 = sand.u32 %s223, 1
          %s2646 = smul.addr %s2645, 256
          %s2647 = scalar_lea.vmem [#allocation4], %s2646
          %2649 = dma.done %s2644, 4096
        $region106: #{tpu_custom_call.1} parent=101 // pred_fallthru
          _
      $region102: #{tpu_custom_call.1} parent=5 // pred_fallthru
        _
    $region6: #{tpu_custom_call.1} parent=1 // loop_footer
      %s21 = sadd.s32 1, %s17
    $region7: #{tpu_custom_call.1} parent=1 // loop_footer_branch
      %16 = sbr.rel target = $region3
    $region8: #{tpu_custom_call.1} parent=1 // loop_exit
      _
    %2650 = vsyncpa [#allocation5], 1
    %s2651 = scalar_lea.sflag [#allocation5], 1
    %2652 = vsyncpa %s2651, 1

</llo_original>
